<compile_context>
chip_gen: v5e
topology: v5e:2x2
jax: 0.10.0
libtpu: 0.0.40
codegen_flags: <defaults>
</compile_context>

<pallas_src>
import functools
import math

import jax
import jax.numpy as jnp
from jax.experimental import pallas as pl
from jax.experimental.pallas import tpu as pltpu

EPS = 1e-5  # torch.nn.LayerNorm default eps


def _layernorm(z, g, b):
    mu = jnp.mean(z, axis=-1, keepdims=True)
    zc = z - mu
    var = jnp.mean(zc * zc, axis=-1, keepdims=True)
    return zc * jax.lax.rsqrt(var + EPS) * g + b


# --------------------------- fused model kernel ------------------------------

def _bert_kernel(x_ref, mask_ref,
                 wq_ref, wk_ref, wv_ref, wo_ref,
                 ln1g_ref, ln1b_ref,
                 w1_ref, b1_ref, w2_ref, b2_ref,
                 ln2g_ref, ln2b_ref,
                 fcw_ref, fcb_ref,
                 o_ref,
                 h_ref,
                 *, N, T, H, dh):
    """One grid step == one transformer encoder block (layer)."""
    l = pl.program_id(0)
    D = H * dh
    M = N * T

    @pl.when(l == 0)
    def _():
        h_ref[...] = x_ref[...]            # load embeddings into resident state

    h = h_ref[...]                          # (M, D) f32, resident in VMEM
    hb = h.astype(jnp.bfloat16)             # bf16 operand for weight matmuls

    # Mask built once per layer (constant input), reused across all heads.
    valid = mask_ref[...] > 0.5             # (N, T, T) bool

    # ---- multi-head self-attention (use_bias=False) ----
    # Per-head weights were packed on the host: no lane slicing of activations,
    # no head concatenation (Wo is applied per head and accumulated).
    attn = jnp.zeros((M, D), jnp.float32)
    # TODO(synk): at real H (e.g. 12) convert to lax.fori_loop / grid axis.
    for hh in range(H):
        q = jnp.dot(hb, wq_ref[hh], preferred_element_type=jnp.float32)  # (M, dh)
        k = jnp.dot(hb, wk_ref[hh], preferred_element_type=jnp.float32)
        v = jnp.dot(hb, wv_ref[hh], preferred_element_type=jnp.float32)
        # Leading-axis reshape only (M = N*T, minor dim unchanged): no relayout.
        q3 = q.reshape(N, T, dh).astype(jnp.bfloat16)
        k3 = k.reshape(N, T, dh).astype(jnp.bfloat16)
        v3 = v.reshape(N, T, dh).astype(jnp.bfloat16)
        # 1/sqrt(dh) is folded into wq at pack time.
        s = jnp.einsum('nqd,nkd->nqk', q3, k3,
                       preferred_element_type=jnp.float32)               # (N, T, T)
        s = jnp.where(valid, s, -1e6)        # d2l masked_softmax fill value
        m = jnp.max(s, axis=-1, keepdims=True)
        e = jnp.exp(s - m)
        denom = jnp.sum(e, axis=-1, keepdims=True)
        p = e * pl.reciprocal(denom, approx=True)                        # EUP slot
        ctx = jnp.einsum('nqk,nkd->nqd', p.astype(jnp.bfloat16), v3,
                         preferred_element_type=jnp.float32)             # (N, T, dh)
        ctx2 = ctx.reshape(M, dh).astype(jnp.bfloat16)
        # Block-row of Wo: sum_h ctx_h @ Wo[h*dh:(h+1)*dh, :] == concat(ctx) @ Wo
        attn = attn + jnp.dot(ctx2, wo_ref[hh],
                              preferred_element_type=jnp.float32)        # (M, D)

    # ---- addnorm1(X, attention(X)) ----
    y = _layernorm(h + attn, ln1g_ref[...], ln1b_ref[...])

    # ---- PositionWiseFFN ----
    yb = y.astype(jnp.bfloat16)
    f = jnp.dot(yb, w1_ref[...], preferred_element_type=jnp.float32) + b1_ref[...]
    f = jnp.maximum(f, 0.0)
    f = jnp.dot(f.astype(jnp.bfloat16), w2_ref[...],
                preferred_element_type=jnp.float32) + b2_ref[...]

    # ---- addnorm2(Y, ffn(Y)) ----
    h_new = _layernorm(y + f, ln2g_ref[...], ln2b_ref[...])
    h_ref[...] = h_new

    # ---- fc_out only after the last layer; single output store ----
    @pl.when(l == pl.num_programs(0) - 1)
    def _():
        o_ref[...] = (jnp.dot(h_new.astype(jnp.bfloat16), fcw_ref[...],
                              preferred_element_type=jnp.float32)
                      + fcb_ref[...]).astype(o_ref.dtype)


# --------------------------- wrapper ------------------------------------------

def bert_forward(packed, tokens, valid_lens):
    N, T = tokens.shape
    L, H, D, dh = packed["wq"].shape
    F = packed["ffn_w1"].shape[2]
    M = N * T

    # Embedding gather + positional add kept as plain-JAX glue (eval: dropout=id).
    x = (packed["emb"][tokens] + packed["pos"][:T][None, :, :]).reshape(M, D)
    x = x.astype(jnp.float32)

    # Validity mask built once for all layers/heads (constant across the grid).
    maskf = (jnp.arange(T, dtype=jnp.int32)[None, None, :]
             < valid_lens.astype(jnp.int32)[:, None, None]).astype(jnp.float32)
    maskf = jnp.broadcast_to(maskf, (N, T, T))

    def const(shape):
        n = len(shape)
        return pl.BlockSpec(shape, lambda l, _n=n: (0,) * _n)

    def perlayer(shape):
        n = len(shape)
        return pl.BlockSpec((None,) + shape, lambda l, _n=n: (l,) + (0,) * _n)

    kernel = functools.partial(_bert_kernel, N=N, T=T, H=H, dh=dh)

    out = pl.pallas_call(
        kernel,
        out_shape=jax.ShapeDtypeStruct((M, D), jnp.float32),
        grid_spec=pltpu.PrefetchScalarGridSpec(
            num_scalar_prefetch=0,
            grid=(L,),                      # one step per encoder layer
            in_specs=[
                const((M, D)),              # x (embeddings)       -- resident
                const((N, T, T)),           # validity mask        -- resident
                perlayer((H, D, dh)),       # Wq per head (bf16, scale folded)
                perlayer((H, D, dh)),       # Wk per head (bf16)
                perlayer((H, D, dh)),       # Wv per head (bf16)
                perlayer((H, dh, D)),       # Wo per head (bf16)
                perlayer((1, D)),           # ln1 gamma
                perlayer((1, D)),           # ln1 beta
                perlayer((D, F)),           # ffn W1 (bf16)
                perlayer((1, F)),           # ffn b1
                perlayer((F, D)),           # ffn W2 (bf16)
                perlayer((1, D)),           # ffn b2
                perlayer((1, D)),           # ln2 gamma
                perlayer((1, D)),           # ln2 beta
                const((D, D)),              # fc_out W (bf16)      -- resident
                const((1, D)),              # fc_out b             -- resident
            ],
            out_specs=pl.BlockSpec((M, D), lambda l: (0, 0)),
            scratch_shapes=[pltpu.VMEM((M, D), jnp.float32)],  # resident hidden state
        ),
        compiler_params=pltpu.CompilerParams(
            # layers are a sequential dependency chain -> arbitrary
            dimension_semantics=("arbitrary",)),
    )(x, maskf,
      packed["wq"], packed["wk"], packed["wv"], packed["wo"],
      packed["ln1_g"], packed["ln1_b"],
      packed["ffn_w1"], packed["ffn_b1"], packed["ffn_w2"], packed["ffn_b2"],
      packed["ln2_g"], packed["ln2_b"],
      packed["fc_w"], packed["fc_b"])
    return out.reshape(N, T, D)


# --------------------------- params -------------------------------------------

def init_params(key, *, vocab_size, embed_size, ffn_hiddens, num_layers, max_len):
    D, F, L = embed_size, ffn_hiddens, num_layers

    def nrm(k, shape, s=0.02):
        return s * jax.random.normal(k, shape, jnp.float32)

    keys = jax.random.split(key, 4 + L)
    wq, wk, wv, wo = [], [], [], []
    w1, b1, w2, b2 = [], [], [], []
    ln1g, ln1b, ln2g, ln2b = [], [], [], []
    for l in range(L):
        ks = jax.random.split(keys[4 + l], 12)
        wq.append(nrm(ks[0], (D, D)))
        wk.append(nrm(ks[1], (D, D)))
        wv.append(nrm(ks[2], (D, D)))
        wo.append(nrm(ks[3], (D, D)))
        w1.append(nrm(ks[4], (D, F)));  b1.append(nrm(ks[5], (1, F)))
        w2.append(nrm(ks[6], (F, D)));  b2.append(nrm(ks[7], (1, D)))
        ln1g.append(1.0 + nrm(ks[8], (1, D)));  ln1b.append(0.5 * nrm(ks[9], (1, D)))
        ln2g.append(1.0 + nrm(ks[10], (1, D))); ln2b.append(0.5 * nrm(ks[11], (1, D)))

    return {
        "emb": nrm(keys[0], (vocab_size, D)),
        "pos": nrm(keys[1], (max_len, D)),
        "fc_w": nrm(keys[2], (D, D)),
        "fc_b": nrm(keys[3], (1, D)),
        "wq": jnp.stack(wq), "wk": jnp.stack(wk), "wv": jnp.stack(wv),
        "wo": jnp.stack(wo),
        "ffn_w1": jnp.stack(w1), "ffn_b1": jnp.stack(b1),
        "ffn_w2": jnp.stack(w2), "ffn_b2": jnp.stack(b2),
        "ln1_g": jnp.stack(ln1g), "ln1_b": jnp.stack(ln1b),
        "ln2_g": jnp.stack(ln2g), "ln2_b": jnp.stack(ln2b),
    }


def pack_params(params, *, num_heads):
    """One-time host-side packing: per-head weight split, scale fold, bf16 cast."""
    D = params["emb"].shape[1]
    H = num_heads
    dh = D // H
    L = params["wq"].shape[0]
    scale = 1.0 / math.sqrt(dh)
    bf = jnp.bfloat16

    def per_head_in(w):   # (L, D, D) -> (L, H, D, dh); head h = columns [h*dh:(h+1)*dh]
        return jnp.transpose(w.reshape(L, D, H, dh), (0, 2, 1, 3))

    def per_head_out(w):  # (L, D, D) -> (L, H, dh, D); head h = rows [h*dh:(h+1)*dh]
        return w.reshape(L, H, dh, D)

    packed = dict(params)
    packed["wq"] = (per_head_in(params["wq"]) * scale).astype(bf)  # fold 1/sqrt(dh)
    packed["wk"] = per_head_in(params["wk"]).astype(bf)
    packed["wv"] = per_head_in(params["wv"]).astype(bf)
    packed["wo"] = per_head_out(params["wo"]).astype(bf)
    packed["ffn_w1"] = params["ffn_w1"].astype(bf)
    packed["ffn_w2"] = params["ffn_w2"].astype(bf)
    packed["fc_w"] = params["fc_w"].astype(bf)
    # LN params, biases, embeddings stay f32.
    return packed


# --------------------------- pure-JAX reference -------------------------------

def reference_forward(params, tokens, valid_lens, *, num_heads):
    N, T = tokens.shape
    D = params["emb"].shape[1]
    H = num_heads
    dh = D // H
    L = params["wq"].shape[0]
    x = params["emb"][tokens] + params["pos"][:T][None, :, :]

    def ln(z, g, b):
        mu = z.mean(-1, keepdims=True)
        var = ((z - mu) ** 2).mean(-1, keepdims=True)
        return (z - mu) / jnp.sqrt(var + EPS) * g + b

    for l in range(L):
        q, k, v = x @ params["wq"][l], x @ params["wk"][l], x @ params["wv"][l]
        split = lambda z: z.reshape(N, T, H, dh).transpose(0, 2, 1, 3)
        qh, kh, vh = split(q), split(k), split(v)
        scores = jnp.einsum("nhqd,nhkd->nhqk", qh, kh) / math.sqrt(dh)
        mask = jnp.arange(T)[None, None, None, :] < valid_lens[:, None, None, None]
        pw = jax.nn.softmax(jnp.where(mask, scores, -1e6), axis=-1)
        ctx = jnp.einsum("nhqk,nhkd->nhqd", pw, vh).transpose(0, 2, 1, 3).reshape(N, T, D)
        y = ln(ctx @ params["wo"][l] + x, params["ln1_g"][l], params["ln1_b"][l])
        f = (jnp.maximum(y @ params["ffn_w1"][l] + params["ffn_b1"][l], 0.0)
             @ params["ffn_w2"][l] + params["ffn_b2"][l])
        x = ln(f + y, params["ln2_g"][l], params["ln2_b"][l])
    return x @ params["fc_w"] + params["fc_b"]


# --------------------------- main ---------------------------------------------

if __name__ == "__main__":
    # BERTModel(vocab_size, embed_size, num_heads, num_layers, hidden_size, max_len)
    # reproduces the reference's argument routing into
    # TransformerEncoderBlock(embed_size, num_heads, hidden_size, dropout), i.e.
    # ffn_num_hiddens <- num_heads and attention heads <- hidden_size.
    vocab_size, embed_size = 100, 32
    num_heads_arg, num_layers, hidden_size_arg, max_len = 64, 2, 4, 16
    ffn_hiddens = num_heads_arg      # 64 (positionwise FFN hidden size)
    attn_heads = hidden_size_arg     # 4  (actual number of attention heads)
    N, T = 2, 8

    key = jax.random.PRNGKey(0)
    kp, kt = jax.random.split(key)
    params = init_params(kp, vocab_size=vocab_size, embed_size=embed_size,
                         ffn_hiddens=ffn_hiddens, num_layers=num_layers,
                         max_len=max_len)
    packed = pack_params(params, num_heads=attn_heads)
    tokens = jax.random.randint(kt, (N, T), 0, vocab_size, dtype=jnp.int32)
    valid_lens = jnp.array([8, 5], dtype=jnp.int32)   # the `mask` arg (valid lengths)

    out = bert_forward(packed, tokens, valid_lens)
    out = jax.block_until_ready(out)

    ref = reference_forward(params, tokens, valid_lens, num_heads=attn_heads)
    assert out.shape == (N, T, embed_size)
    err = float(jnp.max(jnp.abs(out - ref)))
    # bf16 weight streaming + approx-reciprocal softmax vs f32 reference:
    # tolerance loosened per the perf review (observed error is ~1e-3).
    assert err < 2e-2, err
    print("KERNEL_OK")
</pallas_src>

<mosaic_0001>
module attributes {stable_mosaic.version = 11 : i64} {
  func.func @_bert_kernel(%arg0: i32, %arg1: memref<16x32xf32, #tpu.memory_space<vmem>>, %arg2: memref<2x8x8xf32, #tpu.memory_space<vmem>>, %arg3: memref<1x4x32x8xbf16, #tpu.memory_space<vmem>>, %arg4: memref<1x4x32x8xbf16, #tpu.memory_space<vmem>>, %arg5: memref<1x4x32x8xbf16, #tpu.memory_space<vmem>>, %arg6: memref<1x4x8x32xbf16, #tpu.memory_space<vmem>>, %arg7: memref<1x1x32xf32, #tpu.memory_space<vmem>>, %arg8: memref<1x1x32xf32, #tpu.memory_space<vmem>>, %arg9: memref<1x32x64xbf16, #tpu.memory_space<vmem>>, %arg10: memref<1x1x64xf32, #tpu.memory_space<vmem>>, %arg11: memref<1x64x32xbf16, #tpu.memory_space<vmem>>, %arg12: memref<1x1x32xf32, #tpu.memory_space<vmem>>, %arg13: memref<1x1x32xf32, #tpu.memory_space<vmem>>, %arg14: memref<1x1x32xf32, #tpu.memory_space<vmem>>, %arg15: memref<32x32xbf16, #tpu.memory_space<vmem>>, %arg16: memref<1x32xf32, #tpu.memory_space<vmem>>, %arg17: memref<16x32xf32, #tpu.memory_space<vmem>>, %arg18: memref<16x32xf32, #tpu.memory_space<vmem>>) attributes {dimension_semantics = [#tpu.dimension_semantics<arbitrary>], iteration_bounds = array<i64: 2>, scalar_prefetch = 0 : i64, scratch_operands = 1 : i64, tpu.core_type = #tpu.core_type<tc>, window_params = [{pipeline_mode = #tpu.pipeline_mode<synchronous>, transform_indices = @transform_0, window_bounds = array<i64: 16, 32>}, {pipeline_mode = #tpu.pipeline_mode<synchronous>, transform_indices = @transform_1, window_bounds = array<i64: 2, 8, 8>}, {transform_indices = @transform_2, window_bounds = array<i64: 1, 4, 32, 8>}, {transform_indices = @transform_3, window_bounds = array<i64: 1, 4, 32, 8>}, {transform_indices = @transform_4, window_bounds = array<i64: 1, 4, 32, 8>}, {transform_indices = @transform_5, window_bounds = array<i64: 1, 4, 8, 32>}, {transform_indices = @transform_6, window_bounds = array<i64: 1, 1, 32>}, {transform_indices = @transform_7, window_bounds = array<i64: 1, 1, 32>}, {transform_indices = @transform_8, window_bounds = array<i64: 1, 32, 64>}, {transform_indices = @transform_9, window_bounds = array<i64: 1, 1, 64>}, {transform_indices = @transform_10, window_bounds = array<i64: 1, 64, 32>}, {transform_indices = @transform_11, window_bounds = array<i64: 1, 1, 32>}, {transform_indices = @transform_12, window_bounds = array<i64: 1, 1, 32>}, {transform_indices = @transform_13, window_bounds = array<i64: 1, 1, 32>}, {pipeline_mode = #tpu.pipeline_mode<synchronous>, transform_indices = @transform_14, window_bounds = array<i64: 32, 32>}, {pipeline_mode = #tpu.pipeline_mode<synchronous>, transform_indices = @transform_15, window_bounds = array<i64: 1, 32>}, {pipeline_mode = #tpu.pipeline_mode<synchronous>, transform_indices = @transform_16, window_bounds = array<i64: 16, 32>}]} {
    %c0_i32 = arith.constant 0 : i32
    %0 = arith.cmpi eq, %arg0, %c0_i32 : i32
    %1 = arith.extui %0 : i1 to i32
    %c0_i32_0 = arith.constant 0 : i32
    %2 = arith.cmpi ne, %1, %c0_i32_0 : i32
    scf.if %2 {
      %c0_143 = arith.constant 0 : index
      %c0_144 = arith.constant 0 : index
      %225 = vector.load %arg1[%c0_143, %c0_144] : memref<16x32xf32, #tpu.memory_space<vmem>>, vector<16x32xf32>
      %c0_145 = arith.constant 0 : index
      %c0_146 = arith.constant 0 : index
      %226 = vector.load %arg18[%c0_145, %c0_146] : memref<16x32xf32, #tpu.memory_space<vmem>>, vector<16x32xf32>
      tpu.vector_store %arg18[%c0_145, %c0_146], %225 {strides = array<i32>} : memref<16x32xf32, #tpu.memory_space<vmem>>, vector<16x32xf32>,
    } else {
    }
    %c0 = arith.constant 0 : index
    %c0_1 = arith.constant 0 : index
    %3 = vector.load %arg18[%c0, %c0_1] : memref<16x32xf32, #tpu.memory_space<vmem>>, vector<16x32xf32>
    %4 = arith.truncf %3 : vector<16x32xf32> to vector<16x32xbf16>
    %c0_2 = arith.constant 0 : index
    %c0_3 = arith.constant 0 : index
    %c0_4 = arith.constant 0 : index
    %5 = vector.load %arg2[%c0_2, %c0_3, %c0_4] : memref<2x8x8xf32, #tpu.memory_space<vmem>>, vector<2x8x8xf32>
    %cst = arith.constant 5.000000e-01 : f32
    %6 = vector.broadcast %cst : f32 to vector<2x8x8xf32>
    %7 = arith.cmpf ogt, %5, %6 : vector<2x8x8xf32>
    %cst_5 = arith.constant 0.000000e+00 : f32
    %8 = vector.broadcast %cst_5 : f32 to vector<16x32xf32>
    %c0_6 = arith.constant 0 : index
    %c0_7 = arith.constant 0 : index
    %c0_8 = arith.constant 0 : index
    %c0_9 = arith.constant 0 : index
    %9 = vector.load %arg3[%c0_6, %c0_7, %c0_8, %c0_9] : memref<1x4x32x8xbf16, #tpu.memory_space<vmem>>, vector<1x1x32x8xbf16>
    %10 = vector.shape_cast %9 : vector<1x1x32x8xbf16> to vector<32x8xbf16>
    %cst_10 = arith.constant dense<0.000000e+00> : vector<16x8xf32>
    %11 = tpu.matmul %4, %10, %cst_10 {dimension_numbers = #tpu.dot_dimension_numbers<[1], [0], [0], [1], [0, 0, 1, 1], [], []>} : vector<16x32xbf16>, vector<32x8xbf16>, vector<16x8xf32> -> vector<16x8xf32>
    %c0_11 = arith.constant 0 : index
    %c0_12 = arith.constant 0 : index
    %c0_13 = arith.constant 0 : index
    %c0_14 = arith.constant 0 : index
    %12 = vector.load %arg4[%c0_11, %c0_12, %c0_13, %c0_14] : memref<1x4x32x8xbf16, #tpu.memory_space<vmem>>, vector<1x1x32x8xbf16>
    %13 = vector.shape_cast %12 : vector<1x1x32x8xbf16> to vector<32x8xbf16>
    %cst_15 = arith.constant dense<0.000000e+00> : vector<16x8xf32>
    %14 = tpu.matmul %4, %13, %cst_15 {dimension_numbers = #tpu.dot_dimension_numbers<[1], [0], [0], [1], [0, 0, 1, 1], [], []>} : vector<16x32xbf16>, vector<32x8xbf16>, vector<16x8xf32> -> vector<16x8xf32>
    %c0_16 = arith.constant 0 : index
    %c0_17 = arith.constant 0 : index
    %c0_18 = arith.constant 0 : index
    %c0_19 = arith.constant 0 : index
    %15 = vector.load %arg5[%c0_16, %c0_17, %c0_18, %c0_19] : memref<1x4x32x8xbf16, #tpu.memory_space<vmem>>, vector<1x1x32x8xbf16>
    %16 = vector.shape_cast %15 : vector<1x1x32x8xbf16> to vector<32x8xbf16>
    %cst_20 = arith.constant dense<0.000000e+00> : vector<16x8xf32>
    %17 = tpu.matmul %4, %16, %cst_20 {dimension_numbers = #tpu.dot_dimension_numbers<[1], [0], [0], [1], [0, 0, 1, 1], [], []>} : vector<16x32xbf16>, vector<32x8xbf16>, vector<16x8xf32> -> vector<16x8xf32>
    %18 = vector.shape_cast %11 : vector<16x8xf32> to vector<2x8x8xf32>
    %19 = arith.truncf %18 : vector<2x8x8xf32> to vector<2x8x8xbf16>
    %20 = vector.shape_cast %14 : vector<16x8xf32> to vector<2x8x8xf32>
    %21 = arith.truncf %20 : vector<2x8x8xf32> to vector<2x8x8xbf16>
    %22 = vector.shape_cast %17 : vector<16x8xf32> to vector<2x8x8xf32>
    %23 = arith.truncf %22 : vector<2x8x8xf32> to vector<2x8x8xbf16>
    "tpu.trace_start"() <{level = 10 : i32, message = "nqd,nkd->nqk"}> : () -> ()
    %cst_21 = arith.constant dense<0.000000e+00> : vector<2x8x8xf32>
    %24 = tpu.matmul %19, %21, %cst_21 {dimension_numbers = #tpu.dot_dimension_numbers<[2], [2], [1], [1], [0, 0, 0, 1, 1, 1], [0], [0]>} : vector<2x8x8xbf16>, vector<2x8x8xbf16>, vector<2x8x8xf32> -> vector<2x8x8xf32>
    %cst_22 = arith.constant -1.000000e+06 : f32
    "tpu.trace_stop"() : () -> ()
    %25 = vector.broadcast %cst_22 : f32 to vector<2x8x8xf32>
    %26 = arith.select %7, %24, %25 : vector<2x8x8xi1>, vector<2x8x8xf32>
    %cst_23 = arith.constant dense<0xFF800000> : vector<2x8xf32>
    %27 = vector.multi_reduction <maximumf>, %26, %cst_23 [2] : vector<2x8x8xf32> to vector<2x8xf32>
    %28 = vector.shape_cast %27 : vector<2x8xf32> to vector<2x8x1xf32>
    %29 = vector.broadcast %28 : vector<2x8x1xf32> to vector<2x8x8xf32>
    %30 = arith.subf %26, %29 : vector<2x8x8xf32>
    %31 = math.exp %30 : vector<2x8x8xf32>
    %cst_24 = arith.constant dense<0.000000e+00> : vector<2x8xf32>
    %32 = vector.multi_reduction <add>, %31, %cst_24 [2] : vector<2x8x8xf32> to vector<2x8xf32>
    %33 = vector.shape_cast %32 : vector<2x8xf32> to vector<2x8x1xf32>
    %34 = tpu.reciprocal %33 {approx = true} : vector<2x8x1xf32> -> vector<2x8x1xf32>
    %35 = vector.broadcast %34 : vector<2x8x1xf32> to vector<2x8x8xf32>
    %36 = arith.mulf %31, %35 : vector<2x8x8xf32>
    %37 = arith.truncf %36 : vector<2x8x8xf32> to vector<2x8x8xbf16>
    "tpu.trace_start"() <{level = 10 : i32, message = "nqk,nkd->nqd"}> : () -> ()
    %cst_25 = arith.constant dense<0.000000e+00> : vector<2x8x8xf32>
    %38 = tpu.matmul %37, %23, %cst_25 {dimension_numbers = #tpu.dot_dimension_numbers<[2], [1], [1], [2], [0, 0, 0, 1, 1, 2], [0], [0]>} : vector<2x8x8xbf16>, vector<2x8x8xbf16>, vector<2x8x8xf32> -> vector<2x8x8xf32>
    "tpu.trace_stop"() : () -> ()
    %39 = vector.shape_cast %38 : vector<2x8x8xf32> to vector<16x8xf32>
    %40 = arith.truncf %39 : vector<16x8xf32> to vector<16x8xbf16>
    %c0_26 = arith.constant 0 : index
    %c0_27 = arith.constant 0 : index
    %c0_28 = arith.constant 0 : index
    %c0_29 = arith.constant 0 : index
    %41 = vector.load %arg6[%c0_26, %c0_27, %c0_28, %c0_29] : memref<1x4x8x32xbf16, #tpu.memory_space<vmem>>, vector<1x1x8x32xbf16>
    %42 = vector.shape_cast %41 : vector<1x1x8x32xbf16> to vector<8x32xbf16>
    %cst_30 = arith.constant dense<0.000000e+00> : vector<16x32xf32>
    %43 = tpu.matmul %40, %42, %cst_30 {dimension_numbers = #tpu.dot_dimension_numbers<[1], [0], [0], [1], [0, 0, 1, 1], [], []>} : vector<16x8xbf16>, vector<8x32xbf16>, vector<16x32xf32> -> vector<16x32xf32>
    %44 = arith.addf %8, %43 : vector<16x32xf32>
    %c0_31 = arith.constant 0 : index
    %c1 = arith.constant 1 : index
    %c0_32 = arith.constant 0 : index
    %c0_33 = arith.constant 0 : index
    %45 = vector.load %arg3[%c0_31, %c1, %c0_32, %c0_33] : memref<1x4x32x8xbf16, #tpu.memory_space<vmem>>, vector<1x1x32x8xbf16>
    %46 = vector.shape_cast %45 : vector<1x1x32x8xbf16> to vector<32x8xbf16>
    %cst_34 = arith.constant dense<0.000000e+00> : vector<16x8xf32>
    %47 = tpu.matmul %4, %46, %cst_34 {dimension_numbers = #tpu.dot_dimension_numbers<[1], [0], [0], [1], [0, 0, 1, 1], [], []>} : vector<16x32xbf16>, vector<32x8xbf16>, vector<16x8xf32> -> vector<16x8xf32>
    %c0_35 = arith.constant 0 : index
    %c1_36 = arith.constant 1 : index
    %c0_37 = arith.constant 0 : index
    %c0_38 = arith.constant 0 : index
    %48 = vector.load %arg4[%c0_35, %c1_36, %c0_37, %c0_38] : memref<1x4x32x8xbf16, #tpu.memory_space<vmem>>, vector<1x1x32x8xbf16>
    %49 = vector.shape_cast %48 : vector<1x1x32x8xbf16> to vector<32x8xbf16>
    %cst_39 = arith.constant dense<0.000000e+00> : vector<16x8xf32>
    %50 = tpu.matmul %4, %49, %cst_39 {dimension_numbers = #tpu.dot_dimension_numbers<[1], [0], [0], [1], [0, 0, 1, 1], [], []>} : vector<16x32xbf16>, vector<32x8xbf16>, vector<16x8xf32> -> vector<16x8xf32>
    %c0_40 = arith.constant 0 : index
    %c1_41 = arith.constant 1 : index
    %c0_42 = arith.constant 0 : index
    %c0_43 = arith.constant 0 : index
    %51 = vector.load %arg5[%c0_40, %c1_41, %c0_42, %c0_43] : memref<1x4x32x8xbf16, #tpu.memory_space<vmem>>, vector<1x1x32x8xbf16>
    %52 = vector.shape_cast %51 : vector<1x1x32x8xbf16> to vector<32x8xbf16>
    %cst_44 = arith.constant dense<0.000000e+00> : vector<16x8xf32>
    %53 = tpu.matmul %4, %52, %cst_44 {dimension_numbers = #tpu.dot_dimension_numbers<[1], [0], [0], [1], [0, 0, 1, 1], [], []>} : vector<16x32xbf16>, vector<32x8xbf16>, vector<16x8xf32> -> vector<16x8xf32>
    %54 = vector.shape_cast %47 : vector<16x8xf32> to vector<2x8x8xf32>
    %55 = arith.truncf %54 : vector<2x8x8xf32> to vector<2x8x8xbf16>
    %56 = vector.shape_cast %50 : vector<16x8xf32> to vector<2x8x8xf32>
    %57 = arith.truncf %56 : vector<2x8x8xf32> to vector<2x8x8xbf16>
    %58 = vector.shape_cast %53 : vector<16x8xf32> to vector<2x8x8xf32>
    %59 = arith.truncf %58 : vector<2x8x8xf32> to vector<2x8x8xbf16>
    "tpu.trace_start"() <{level = 10 : i32, message = "nqd,nkd->nqk"}> : () -> ()
    %cst_45 = arith.constant dense<0.000000e+00> : vector<2x8x8xf32>
    %60 = tpu.matmul %55, %57, %cst_45 {dimension_numbers = #tpu.dot_dimension_numbers<[2], [2], [1], [1], [0, 0, 0, 1, 1, 1], [0], [0]>} : vector<2x8x8xbf16>, vector<2x8x8xbf16>, vector<2x8x8xf32> -> vector<2x8x8xf32>
    %cst_46 = arith.constant -1.000000e+06 : f32
    "tpu.trace_stop"() : () -> ()
    %61 = vector.broadcast %cst_46 : f32 to vector<2x8x8xf32>
    %62 = arith.select %7, %60, %61 : vector<2x8x8xi1>, vector<2x8x8xf32>
    %cst_47 = arith.constant dense<0xFF800000> : vector<2x8xf32>
    %63 = vector.multi_reduction <maximumf>, %62, %cst_47 [2] : vector<2x8x8xf32> to vector<2x8xf32>
    %64 = vector.shape_cast %63 : vector<2x8xf32> to vector<2x8x1xf32>
    %65 = vector.broadcast %64 : vector<2x8x1xf32> to vector<2x8x8xf32>
    %66 = arith.subf %62, %65 : vector<2x8x8xf32>
    %67 = math.exp %66 : vector<2x8x8xf32>
    %cst_48 = arith.constant dense<0.000000e+00> : vector<2x8xf32>
    %68 = vector.multi_reduction <add>, %67, %cst_48 [2] : vector<2x8x8xf32> to vector<2x8xf32>
    %69 = vector.shape_cast %68 : vector<2x8xf32> to vector<2x8x1xf32>
    %70 = tpu.reciprocal %69 {approx = true} : vector<2x8x1xf32> -> vector<2x8x1xf32>
    %71 = vector.broadcast %70 : vector<2x8x1xf32> to vector<2x8x8xf32>
    %72 = arith.mulf %67, %71 : vector<2x8x8xf32>
    %73 = arith.truncf %72 : vector<2x8x8xf32> to vector<2x8x8xbf16>
    "tpu.trace_start"() <{level = 10 : i32, message = "nqk,nkd->nqd"}> : () -> ()
    %cst_49 = arith.constant dense<0.000000e+00> : vector<2x8x8xf32>
    %74 = tpu.matmul %73, %59, %cst_49 {dimension_numbers = #tpu.dot_dimension_numbers<[2], [1], [1], [2], [0, 0, 0, 1, 1, 2], [0], [0]>} : vector<2x8x8xbf16>, vector<2x8x8xbf16>, vector<2x8x8xf32> -> vector<2x8x8xf32>
    "tpu.trace_stop"() : () -> ()
    %75 = vector.shape_cast %74 : vector<2x8x8xf32> to vector<16x8xf32>
    %76 = arith.truncf %75 : vector<16x8xf32> to vector<16x8xbf16>
    %c0_50 = arith.constant 0 : index
    %c1_51 = arith.constant 1 : index
    %c0_52 = arith.constant 0 : index
    %c0_53 = arith.constant 0 : index
    %77 = vector.load %arg6[%c0_50, %c1_51, %c0_52, %c0_53] : memref<1x4x8x32xbf16, #tpu.memory_space<vmem>>, vector<1x1x8x32xbf16>
    %78 = vector.shape_cast %77 : vector<1x1x8x32xbf16> to vector<8x32xbf16>
    %cst_54 = arith.constant dense<0.000000e+00> : vector<16x32xf32>
    %79 = tpu.matmul %76, %78, %cst_54 {dimension_numbers = #tpu.dot_dimension_numbers<[1], [0], [0], [1], [0, 0, 1, 1], [], []>} : vector<16x8xbf16>, vector<8x32xbf16>, vector<16x32xf32> -> vector<16x32xf32>
    %80 = arith.addf %44, %79 : vector<16x32xf32>
    %c0_55 = arith.constant 0 : index
    %c2 = arith.constant 2 : index
    %c0_56 = arith.constant 0 : index
    %c0_57 = arith.constant 0 : index
    %81 = vector.load %arg3[%c0_55, %c2, %c0_56, %c0_57] : memref<1x4x32x8xbf16, #tpu.memory_space<vmem>>, vector<1x1x32x8xbf16>
    %82 = vector.shape_cast %81 : vector<1x1x32x8xbf16> to vector<32x8xbf16>
    %cst_58 = arith.constant dense<0.000000e+00> : vector<16x8xf32>
    %83 = tpu.matmul %4, %82, %cst_58 {dimension_numbers = #tpu.dot_dimension_numbers<[1], [0], [0], [1], [0, 0, 1, 1], [], []>} : vector<16x32xbf16>, vector<32x8xbf16>, vector<16x8xf32> -> vector<16x8xf32>
    %c0_59 = arith.constant 0 : index
    %c2_60 = arith.constant 2 : index
    %c0_61 = arith.constant 0 : index
    %c0_62 = arith.constant 0 : index
    %84 = vector.load %arg4[%c0_59, %c2_60, %c0_61, %c0_62] : memref<1x4x32x8xbf16, #tpu.memory_space<vmem>>, vector<1x1x32x8xbf16>
    %85 = vector.shape_cast %84 : vector<1x1x32x8xbf16> to vector<32x8xbf16>
    %cst_63 = arith.constant dense<0.000000e+00> : vector<16x8xf32>
    %86 = tpu.matmul %4, %85, %cst_63 {dimension_numbers = #tpu.dot_dimension_numbers<[1], [0], [0], [1], [0, 0, 1, 1], [], []>} : vector<16x32xbf16>, vector<32x8xbf16>, vector<16x8xf32> -> vector<16x8xf32>
    %c0_64 = arith.constant 0 : index
    %c2_65 = arith.constant 2 : index
    %c0_66 = arith.constant 0 : index
    %c0_67 = arith.constant 0 : index
    %87 = vector.load %arg5[%c0_64, %c2_65, %c0_66, %c0_67] : memref<1x4x32x8xbf16, #tpu.memory_space<vmem>>, vector<1x1x32x8xbf16>
    %88 = vector.shape_cast %87 : vector<1x1x32x8xbf16> to vector<32x8xbf16>
    %cst_68 = arith.constant dense<0.000000e+00> : vector<16x8xf32>
    %89 = tpu.matmul %4, %88, %cst_68 {dimension_numbers = #tpu.dot_dimension_numbers<[1], [0], [0], [1], [0, 0, 1, 1], [], []>} : vector<16x32xbf16>, vector<32x8xbf16>, vector<16x8xf32> -> vector<16x8xf32>
    %90 = vector.shape_cast %83 : vector<16x8xf32> to vector<2x8x8xf32>
    %91 = arith.truncf %90 : vector<2x8x8xf32> to vector<2x8x8xbf16>
    %92 = vector.shape_cast %86 : vector<16x8xf32> to vector<2x8x8xf32>
    %93 = arith.truncf %92 : vector<2x8x8xf32> to vector<2x8x8xbf16>
    %94 = vector.shape_cast %89 : vector<16x8xf32> to vector<2x8x8xf32>
    %95 = arith.truncf %94 : vector<2x8x8xf32> to vector<2x8x8xbf16>
    "tpu.trace_start"() <{level = 10 : i32, message = "nqd,nkd->nqk"}> : () -> ()
    %cst_69 = arith.constant dense<0.000000e+00> : vector<2x8x8xf32>
    %96 = tpu.matmul %91, %93, %cst_69 {dimension_numbers = #tpu.dot_dimension_numbers<[2], [2], [1], [1], [0, 0, 0, 1, 1, 1], [0], [0]>} : vector<2x8x8xbf16>, vector<2x8x8xbf16>, vector<2x8x8xf32> -> vector<2x8x8xf32>
    %cst_70 = arith.constant -1.000000e+06 : f32
    "tpu.trace_stop"() : () -> ()
    %97 = vector.broadcast %cst_70 : f32 to vector<2x8x8xf32>
    %98 = arith.select %7, %96, %97 : vector<2x8x8xi1>, vector<2x8x8xf32>
    %cst_71 = arith.constant dense<0xFF800000> : vector<2x8xf32>
    %99 = vector.multi_reduction <maximumf>, %98, %cst_71 [2] : vector<2x8x8xf32> to vector<2x8xf32>
    %100 = vector.shape_cast %99 : vector<2x8xf32> to vector<2x8x1xf32>
    %101 = vector.broadcast %100 : vector<2x8x1xf32> to vector<2x8x8xf32>
    %102 = arith.subf %98, %101 : vector<2x8x8xf32>
    %103 = math.exp %102 : vector<2x8x8xf32>
    %cst_72 = arith.constant dense<0.000000e+00> : vector<2x8xf32>
    %104 = vector.multi_reduction <add>, %103, %cst_72 [2] : vector<2x8x8xf32> to vector<2x8xf32>
    %105 = vector.shape_cast %104 : vector<2x8xf32> to vector<2x8x1xf32>
    %106 = tpu.reciprocal %105 {approx = true} : vector<2x8x1xf32> -> vector<2x8x1xf32>
    %107 = vector.broadcast %106 : vector<2x8x1xf32> to vector<2x8x8xf32>
    %108 = arith.mulf %103, %107 : vector<2x8x8xf32>
    %109 = arith.truncf %108 : vector<2x8x8xf32> to vector<2x8x8xbf16>
    "tpu.trace_start"() <{level = 10 : i32, message = "nqk,nkd->nqd"}> : () -> ()
    %cst_73 = arith.constant dense<0.000000e+00> : vector<2x8x8xf32>
    %110 = tpu.matmul %109, %95, %cst_73 {dimension_numbers = #tpu.dot_dimension_numbers<[2], [1], [1], [2], [0, 0, 0, 1, 1, 2], [0], [0]>} : vector<2x8x8xbf16>, vector<2x8x8xbf16>, vector<2x8x8xf32> -> vector<2x8x8xf32>
    "tpu.trace_stop"() : () -> ()
    %111 = vector.shape_cast %110 : vector<2x8x8xf32> to vector<16x8xf32>
    %112 = arith.truncf %111 : vector<16x8xf32> to vector<16x8xbf16>
    %c0_74 = arith.constant 0 : index
    %c2_75 = arith.constant 2 : index
    %c0_76 = arith.constant 0 : index
    %c0_77 = arith.constant 0 : index
    %113 = vector.load %arg6[%c0_74, %c2_75, %c0_76, %c0_77] : memref<1x4x8x32xbf16, #tpu.memory_space<vmem>>, vector<1x1x8x32xbf16>
    %114 = vector.shape_cast %113 : vector<1x1x8x32xbf16> to vector<8x32xbf16>
    %cst_78 = arith.constant dense<0.000000e+00> : vector<16x32xf32>
    %115 = tpu.matmul %112, %114, %cst_78 {dimension_numbers = #tpu.dot_dimension_numbers<[1], [0], [0], [1], [0, 0, 1, 1], [], []>} : vector<16x8xbf16>, vector<8x32xbf16>, vector<16x32xf32> -> vector<16x32xf32>
    %116 = arith.addf %80, %115 : vector<16x32xf32>
    %c0_79 = arith.constant 0 : index
    %c3 = arith.constant 3 : index
    %c0_80 = arith.constant 0 : index
    %c0_81 = arith.constant 0 : index
    %117 = vector.load %arg3[%c0_79, %c3, %c0_80, %c0_81] : memref<1x4x32x8xbf16, #tpu.memory_space<vmem>>, vector<1x1x32x8xbf16>
    %118 = vector.shape_cast %117 : vector<1x1x32x8xbf16> to vector<32x8xbf16>
    %cst_82 = arith.constant dense<0.000000e+00> : vector<16x8xf32>
    %119 = tpu.matmul %4, %118, %cst_82 {dimension_numbers = #tpu.dot_dimension_numbers<[1], [0], [0], [1], [0, 0, 1, 1], [], []>} : vector<16x32xbf16>, vector<32x8xbf16>, vector<16x8xf32> -> vector<16x8xf32>
    %c0_83 = arith.constant 0 : index
    %c3_84 = arith.constant 3 : index
    %c0_85 = arith.constant 0 : index
    %c0_86 = arith.constant 0 : index
    %120 = vector.load %arg4[%c0_83, %c3_84, %c0_85, %c0_86] : memref<1x4x32x8xbf16, #tpu.memory_space<vmem>>, vector<1x1x32x8xbf16>
    %121 = vector.shape_cast %120 : vector<1x1x32x8xbf16> to vector<32x8xbf16>
    %cst_87 = arith.constant dense<0.000000e+00> : vector<16x8xf32>
    %122 = tpu.matmul %4, %121, %cst_87 {dimension_numbers = #tpu.dot_dimension_numbers<[1], [0], [0], [1], [0, 0, 1, 1], [], []>} : vector<16x32xbf16>, vector<32x8xbf16>, vector<16x8xf32> -> vector<16x8xf32>
    %c0_88 = arith.constant 0 : index
    %c3_89 = arith.constant 3 : index
    %c0_90 = arith.constant 0 : index
    %c0_91 = arith.constant 0 : index
    %123 = vector.load %arg5[%c0_88, %c3_89, %c0_90, %c0_91] : memref<1x4x32x8xbf16, #tpu.memory_space<vmem>>, vector<1x1x32x8xbf16>
    %124 = vector.shape_cast %123 : vector<1x1x32x8xbf16> to vector<32x8xbf16>
    %cst_92 = arith.constant dense<0.000000e+00> : vector<16x8xf32>
    %125 = tpu.matmul %4, %124, %cst_92 {dimension_numbers = #tpu.dot_dimension_numbers<[1], [0], [0], [1], [0, 0, 1, 1], [], []>} : vector<16x32xbf16>, vector<32x8xbf16>, vector<16x8xf32> -> vector<16x8xf32>
    %126 = vector.shape_cast %119 : vector<16x8xf32> to vector<2x8x8xf32>
    %127 = arith.truncf %126 : vector<2x8x8xf32> to vector<2x8x8xbf16>
    %128 = vector.shape_cast %122 : vector<16x8xf32> to vector<2x8x8xf32>
    %129 = arith.truncf %128 : vector<2x8x8xf32> to vector<2x8x8xbf16>
    %130 = vector.shape_cast %125 : vector<16x8xf32> to vector<2x8x8xf32>
    %131 = arith.truncf %130 : vector<2x8x8xf32> to vector<2x8x8xbf16>
    "tpu.trace_start"() <{level = 10 : i32, message = "nqd,nkd->nqk"}> : () -> ()
    %cst_93 = arith.constant dense<0.000000e+00> : vector<2x8x8xf32>
    %132 = tpu.matmul %127, %129, %cst_93 {dimension_numbers = #tpu.dot_dimension_numbers<[2], [2], [1], [1], [0, 0, 0, 1, 1, 1], [0], [0]>} : vector<2x8x8xbf16>, vector<2x8x8xbf16>, vector<2x8x8xf32> -> vector<2x8x8xf32>
    %cst_94 = arith.constant -1.000000e+06 : f32
    "tpu.trace_stop"() : () -> ()
    %133 = vector.broadcast %cst_94 : f32 to vector<2x8x8xf32>
    %134 = arith.select %7, %132, %133 : vector<2x8x8xi1>, vector<2x8x8xf32>
    %cst_95 = arith.constant dense<0xFF800000> : vector<2x8xf32>
    %135 = vector.multi_reduction <maximumf>, %134, %cst_95 [2] : vector<2x8x8xf32> to vector<2x8xf32>
    %136 = vector.shape_cast %135 : vector<2x8xf32> to vector<2x8x1xf32>
    %137 = vector.broadcast %136 : vector<2x8x1xf32> to vector<2x8x8xf32>
    %138 = arith.subf %134, %137 : vector<2x8x8xf32>
    %139 = math.exp %138 : vector<2x8x8xf32>
    %cst_96 = arith.constant dense<0.000000e+00> : vector<2x8xf32>
    %140 = vector.multi_reduction <add>, %139, %cst_96 [2] : vector<2x8x8xf32> to vector<2x8xf32>
    %141 = vector.shape_cast %140 : vector<2x8xf32> to vector<2x8x1xf32>
    %142 = tpu.reciprocal %141 {approx = true} : vector<2x8x1xf32> -> vector<2x8x1xf32>
    %143 = vector.broadcast %142 : vector<2x8x1xf32> to vector<2x8x8xf32>
    %144 = arith.mulf %139, %143 : vector<2x8x8xf32>
    %145 = arith.truncf %144 : vector<2x8x8xf32> to vector<2x8x8xbf16>
    "tpu.trace_start"() <{level = 10 : i32, message = "nqk,nkd->nqd"}> : () -> ()
    %cst_97 = arith.constant dense<0.000000e+00> : vector<2x8x8xf32>
    %146 = tpu.matmul %145, %131, %cst_97 {dimension_numbers = #tpu.dot_dimension_numbers<[2], [1], [1], [2], [0, 0, 0, 1, 1, 2], [0], [0]>} : vector<2x8x8xbf16>, vector<2x8x8xbf16>, vector<2x8x8xf32> -> vector<2x8x8xf32>
    "tpu.trace_stop"() : () -> ()
    %147 = vector.shape_cast %146 : vector<2x8x8xf32> to vector<16x8xf32>
    %148 = arith.truncf %147 : vector<16x8xf32> to vector<16x8xbf16>
    %c0_98 = arith.constant 0 : index
    %c3_99 = arith.constant 3 : index
    %c0_100 = arith.constant 0 : index
    %c0_101 = arith.constant 0 : index
    %149 = vector.load %arg6[%c0_98, %c3_99, %c0_100, %c0_101] : memref<1x4x8x32xbf16, #tpu.memory_space<vmem>>, vector<1x1x8x32xbf16>
    %150 = vector.shape_cast %149 : vector<1x1x8x32xbf16> to vector<8x32xbf16>
    %cst_102 = arith.constant dense<0.000000e+00> : vector<16x32xf32>
    %151 = tpu.matmul %148, %150, %cst_102 {dimension_numbers = #tpu.dot_dimension_numbers<[1], [0], [0], [1], [0, 0, 1, 1], [], []>} : vector<16x8xbf16>, vector<8x32xbf16>, vector<16x32xf32> -> vector<16x32xf32>
    %152 = arith.addf %116, %151 : vector<16x32xf32>
    %153 = arith.addf %3, %152 : vector<16x32xf32>
    %c0_103 = arith.constant 0 : index
    %c0_104 = arith.constant 0 : index
    %c0_105 = arith.constant 0 : index
    %154 = vector.load %arg7[%c0_103, %c0_104, %c0_105] : memref<1x1x32xf32, #tpu.memory_space<vmem>>, vector<1x1x32xf32>
    %155 = vector.shape_cast %154 : vector<1x1x32xf32> to vector<1x32xf32>
    %c0_106 = arith.constant 0 : index
    %c0_107 = arith.constant 0 : index
    %c0_108 = arith.constant 0 : index
    %156 = vector.load %arg8[%c0_106, %c0_107, %c0_108] : memref<1x1x32xf32, #tpu.memory_space<vmem>>, vector<1x1x32xf32>
    %157 = vector.shape_cast %156 : vector<1x1x32xf32> to vector<1x32xf32>
    %cst_109 = arith.constant dense<0.000000e+00> : vector<16xf32>
    %158 = vector.multi_reduction <add>, %153, %cst_109 [1] : vector<16x32xf32> to vector<16xf32>
    %159 = vector.shape_cast %158 : vector<16xf32> to vector<16x1xf32>
    %cst_110 = arith.constant 3.200000e+01 : f32
    %160 = vector.broadcast %cst_110 : f32 to vector<16x1xf32>
    %161 = arith.divf %159, %160 : vector<16x1xf32>
    %162 = vector.broadcast %161 : vector<16x1xf32> to vector<16x32xf32>
    %163 = arith.subf %153, %162 : vector<16x32xf32>
    %164 = arith.mulf %163, %163 : vector<16x32xf32>
    %cst_111 = arith.constant dense<0.000000e+00> : vector<16xf32>
    %165 = vector.multi_reduction <add>, %164, %cst_111 [1] : vector<16x32xf32> to vector<16xf32>
    %166 = vector.shape_cast %165 : vector<16xf32> to vector<16x1xf32>
    %cst_112 = arith.constant 3.200000e+01 : f32
    %167 = vector.broadcast %cst_112 : f32 to vector<16x1xf32>
    %168 = arith.divf %166, %167 : vector<16x1xf32>
    %cst_113 = arith.constant 9.99999974E-6 : f32
    %169 = vector.broadcast %cst_113 : f32 to vector<16x1xf32>
    %170 = arith.addf %168, %169 : vector<16x1xf32>
    %171 = math.rsqrt %170 : vector<16x1xf32>
    %172 = vector.broadcast %171 : vector<16x1xf32> to vector<16x32xf32>
    %173 = arith.mulf %163, %172 : vector<16x32xf32>
    %174 = vector.broadcast %155 : vector<1x32xf32> to vector<16x32xf32>
    %175 = arith.mulf %173, %174 : vector<16x32xf32>
    %176 = vector.broadcast %157 : vector<1x32xf32> to vector<16x32xf32>
    %177 = arith.addf %175, %176 : vector<16x32xf32>
    %178 = arith.truncf %177 : vector<16x32xf32> to vector<16x32xbf16>
    %c0_114 = arith.constant 0 : index
    %c0_115 = arith.constant 0 : index
    %c0_116 = arith.constant 0 : index
    %179 = vector.load %arg9[%c0_114, %c0_115, %c0_116] : memref<1x32x64xbf16, #tpu.memory_space<vmem>>, vector<1x32x64xbf16>
    %180 = vector.shape_cast %179 : vector<1x32x64xbf16> to vector<32x64xbf16>
    %cst_117 = arith.constant dense<0.000000e+00> : vector<16x64xf32>
    %181 = tpu.matmul %178, %180, %cst_117 {dimension_numbers = #tpu.dot_dimension_numbers<[1], [0], [0], [1], [0, 0, 1, 1], [], []>} : vector<16x32xbf16>, vector<32x64xbf16>, vector<16x64xf32> -> vector<16x64xf32>
    %c0_118 = arith.constant 0 : index
    %c0_119 = arith.constant 0 : index
    %c0_120 = arith.constant 0 : index
    %182 = vector.load %arg10[%c0_118, %c0_119, %c0_120] : memref<1x1x64xf32, #tpu.memory_space<vmem>>, vector<1x1x64xf32>
    %183 = vector.shape_cast %182 : vector<1x1x64xf32> to vector<1x64xf32>
    %184 = vector.broadcast %183 : vector<1x64xf32> to vector<16x64xf32>
    %185 = arith.addf %181, %184 : vector<16x64xf32>
    %cst_121 = arith.constant 0.000000e+00 : f32
    %186 = vector.broadcast %cst_121 : f32 to vector<16x64xf32>
    %187 = arith.maximumf %185, %186 : vector<16x64xf32>
    %188 = arith.truncf %187 : vector<16x64xf32> to vector<16x64xbf16>
    %c0_122 = arith.constant 0 : index
    %c0_123 = arith.constant 0 : index
    %c0_124 = arith.constant 0 : index
    %189 = vector.load %arg11[%c0_122, %c0_123, %c0_124] : memref<1x64x32xbf16, #tpu.memory_space<vmem>>, vector<1x64x32xbf16>
    %190 = vector.shape_cast %189 : vector<1x64x32xbf16> to vector<64x32xbf16>
    %cst_125 = arith.constant dense<0.000000e+00> : vector<16x32xf32>
    %191 = tpu.matmul %188, %190, %cst_125 {dimension_numbers = #tpu.dot_dimension_numbers<[1], [0], [0], [1], [0, 0, 1, 1], [], []>} : vector<16x64xbf16>, vector<64x32xbf16>, vector<16x32xf32> -> vector<16x32xf32>
    %c0_126 = arith.constant 0 : index
    %c0_127 = arith.constant 0 : index
    %c0_128 = arith.constant 0 : index
    %192 = vector.load %arg12[%c0_126, %c0_127, %c0_128] : memref<1x1x32xf32, #tpu.memory_space<vmem>>, vector<1x1x32xf32>
    %193 = vector.shape_cast %192 : vector<1x1x32xf32> to vector<1x32xf32>
    %194 = vector.broadcast %193 : vector<1x32xf32> to vector<16x32xf32>
    %195 = arith.addf %191, %194 : vector<16x32xf32>
    %196 = arith.addf %177, %195 : vector<16x32xf32>
    %c0_129 = arith.constant 0 : index
    %c0_130 = arith.constant 0 : index
    %c0_131 = arith.constant 0 : index
    %197 = vector.load %arg13[%c0_129, %c0_130, %c0_131] : memref<1x1x32xf32, #tpu.memory_space<vmem>>, vector<1x1x32xf32>
    %198 = vector.shape_cast %197 : vector<1x1x32xf32> to vector<1x32xf32>
    %c0_132 = arith.constant 0 : index
    %c0_133 = arith.constant 0 : index
    %c0_134 = arith.constant 0 : index
    %199 = vector.load %arg14[%c0_132, %c0_133, %c0_134] : memref<1x1x32xf32, #tpu.memory_space<vmem>>, vector<1x1x32xf32>
    %200 = vector.shape_cast %199 : vector<1x1x32xf32> to vector<1x32xf32>
    %cst_135 = arith.constant dense<0.000000e+00> : vector<16xf32>
    %201 = vector.multi_reduction <add>, %196, %cst_135 [1] : vector<16x32xf32> to vector<16xf32>
    %202 = vector.shape_cast %201 : vector<16xf32> to vector<16x1xf32>
    %cst_136 = arith.constant 3.200000e+01 : f32
    %203 = vector.broadcast %cst_136 : f32 to vector<16x1xf32>
    %204 = arith.divf %202, %203 : vector<16x1xf32>
    %205 = vector.broadcast %204 : vector<16x1xf32> to vector<16x32xf32>
    %206 = arith.subf %196, %205 : vector<16x32xf32>
    %207 = arith.mulf %206, %206 : vector<16x32xf32>
    %cst_137 = arith.constant dense<0.000000e+00> : vector<16xf32>
    %208 = vector.multi_reduction <add>, %207, %cst_137 [1] : vector<16x32xf32> to vector<16xf32>
    %209 = vector.shape_cast %208 : vector<16xf32> to vector<16x1xf32>
    %cst_138 = arith.constant 3.200000e+01 : f32
    %210 = vector.broadcast %cst_138 : f32 to vector<16x1xf32>
    %211 = arith.divf %209, %210 : vector<16x1xf32>
    %cst_139 = arith.constant 9.99999974E-6 : f32
    %212 = vector.broadcast %cst_139 : f32 to vector<16x1xf32>
    %213 = arith.addf %211, %212 : vector<16x1xf32>
    %214 = math.rsqrt %213 : vector<16x1xf32>
    %215 = vector.broadcast %214 : vector<16x1xf32> to vector<16x32xf32>
    %216 = arith.mulf %206, %215 : vector<16x32xf32>
    %217 = vector.broadcast %198 : vector<1x32xf32> to vector<16x32xf32>
    %218 = arith.mulf %216, %217 : vector<16x32xf32>
    %219 = vector.broadcast %200 : vector<1x32xf32> to vector<16x32xf32>
    %220 = arith.addf %218, %219 : vector<16x32xf32>
    %c0_140 = arith.constant 0 : index
    %c0_141 = arith.constant 0 : index
    %221 = vector.load %arg18[%c0_140, %c0_141] : memref<16x32xf32, #tpu.memory_space<vmem>>, vector<16x32xf32>
    tpu.vector_store %arg18[%c0_140, %c0_141], %220 {strides = array<i32>} : memref<16x32xf32, #tpu.memory_space<vmem>>, vector<16x32xf32>,
    %c1_i32 = arith.constant 1 : i32
    %222 = arith.cmpi eq, %arg0, %c1_i32 : i32
    %223 = arith.extui %222 : i1 to i32
    %c0_i32_142 = arith.constant 0 : i32
    %224 = arith.cmpi ne, %223, %c0_i32_142 : i32
    scf.if %224 {
      %225 = arith.truncf %220 : vector<16x32xf32> to vector<16x32xbf16>
      %c0_143 = arith.constant 0 : index
      %c0_144 = arith.constant 0 : index
      %226 = vector.load %arg15[%c0_143, %c0_144] : memref<32x32xbf16, #tpu.memory_space<vmem>>, vector<32x32xbf16>
      %cst_145 = arith.constant dense<0.000000e+00> : vector<16x32xf32>
      %227 = tpu.matmul %225, %226, %cst_145 {dimension_numbers = #tpu.dot_dimension_numbers<[1], [0], [0], [1], [0, 0, 1, 1], [], []>} : vector<16x32xbf16>, vector<32x32xbf16>, vector<16x32xf32> -> vector<16x32xf32>
      %c0_146 = arith.constant 0 : index
      %c0_147 = arith.constant 0 : index
      %228 = vector.load %arg16[%c0_146, %c0_147] : memref<1x32xf32, #tpu.memory_space<vmem>>, vector<1x32xf32>
      %229 = vector.broadcast %228 : vector<1x32xf32> to vector<16x32xf32>
      %230 = arith.addf %227, %229 : vector<16x32xf32>
      %c0_148 = arith.constant 0 : index
      %c0_149 = arith.constant 0 : index
      %231 = vector.load %arg17[%c0_148, %c0_149] : memref<16x32xf32, #tpu.memory_space<vmem>>, vector<16x32xf32>
      tpu.vector_store %arg17[%c0_148, %c0_149], %230 {strides = array<i32>} : memref<16x32xf32, #tpu.memory_space<vmem>>, vector<16x32xf32>,
    } else {
    }
    return
  }
  func.func @transform_0(%arg0: i32) -> (i32, i32) {
    %c0_i32 = arith.constant 0 : i32
    %c0_i32_0 = arith.constant 0 : i32
    %c0_i32_1 = arith.constant 0 : i32
    return %c0_i32, %c0_i32_0 : i32, i32
  }
  func.func @transform_1(%arg0: i32) -> (i32, i32, i32) {
    %c0_i32 = arith.constant 0 : i32
    %c0_i32_0 = arith.constant 0 : i32
    %c0_i32_1 = arith.constant 0 : i32
    %c0_i32_2 = arith.constant 0 : i32
    return %c0_i32, %c0_i32_0, %c0_i32_1 : i32, i32, i32
  }
  func.func @transform_2(%arg0: i32) -> (i32, i32, i32, i32) {
    %c0_i32 = arith.constant 0 : i32
    %c0_i32_0 = arith.constant 0 : i32
    %c0_i32_1 = arith.constant 0 : i32
    %c0_i32_2 = arith.constant 0 : i32
    return %arg0, %c0_i32, %c0_i32_0, %c0_i32_1 : i32, i32, i32, i32
  }
  func.func @transform_3(%arg0: i32) -> (i32, i32, i32, i32) {
    %c0_i32 = arith.constant 0 : i32
    %c0_i32_0 = arith.constant 0 : i32
    %c0_i32_1 = arith.constant 0 : i32
    %c0_i32_2 = arith.constant 0 : i32
    return %arg0, %c0_i32, %c0_i32_0, %c0_i32_1 : i32, i32, i32, i32
  }
  func.func @transform_4(%arg0: i32) -> (i32, i32, i32, i32) {
    %c0_i32 = arith.constant 0 : i32
    %c0_i32_0 = arith.constant 0 : i32
    %c0_i32_1 = arith.constant 0 : i32
    %c0_i32_2 = arith.constant 0 : i32
    return %arg0, %c0_i32, %c0_i32_0, %c0_i32_1 : i32, i32, i32, i32
  }
  func.func @transform_5(%arg0: i32) -> (i32, i32, i32, i32) {
    %c0_i32 = arith.constant 0 : i32
    %c0_i32_0 = arith.constant 0 : i32
    %c0_i32_1 = arith.constant 0 : i32
    %c0_i32_2 = arith.constant 0 : i32
    return %arg0, %c0_i32, %c0_i32_0, %c0_i32_1 : i32, i32, i32, i32
  }
  func.func @transform_6(%arg0: i32) -> (i32, i32, i32) {
    %c0_i32 = arith.constant 0 : i32
    %c0_i32_0 = arith.constant 0 : i32
    %c0_i32_1 = arith.constant 0 : i32
    return %arg0, %c0_i32, %c0_i32_0 : i32, i32, i32
  }
  func.func @transform_7(%arg0: i32) -> (i32, i32, i32) {
    %c0_i32 = arith.constant 0 : i32
    %c0_i32_0 = arith.constant 0 : i32
    %c0_i32_1 = arith.constant 0 : i32
    return %arg0, %c0_i32, %c0_i32_0 : i32, i32, i32
  }
  func.func @transform_8(%arg0: i32) -> (i32, i32, i32) {
    %c0_i32 = arith.constant 0 : i32
    %c0_i32_0 = arith.constant 0 : i32
    %c0_i32_1 = arith.constant 0 : i32
    return %arg0, %c0_i32, %c0_i32_0 : i32, i32, i32
  }
  func.func @transform_9(%arg0: i32) -> (i32, i32, i32) {
    %c0_i32 = arith.constant 0 : i32
    %c0_i32_0 = arith.constant 0 : i32
    %c0_i32_1 = arith.constant 0 : i32
    return %arg0, %c0_i32, %c0_i32_0 : i32, i32, i32
  }
  func.func @transform_10(%arg0: i32) -> (i32, i32, i32) {
    %c0_i32 = arith.constant 0 : i32
    %c0_i32_0 = arith.constant 0 : i32
    %c0_i32_1 = arith.constant 0 : i32
    return %arg0, %c0_i32, %c0_i32_0 : i32, i32, i32
  }
  func.func @transform_11(%arg0: i32) -> (i32, i32, i32) {
    %c0_i32 = arith.constant 0 : i32
    %c0_i32_0 = arith.constant 0 : i32
    %c0_i32_1 = arith.constant 0 : i32
    return %arg0, %c0_i32, %c0_i32_0 : i32, i32, i32
  }
  func.func @transform_12(%arg0: i32) -> (i32, i32, i32) {
    %c0_i32 = arith.constant 0 : i32
    %c0_i32_0 = arith.constant 0 : i32
    %c0_i32_1 = arith.constant 0 : i32
    return %arg0, %c0_i32, %c0_i32_0 : i32, i32, i32
  }
  func.func @transform_13(%arg0: i32) -> (i32, i32, i32) {
    %c0_i32 = arith.constant 0 : i32
    %c0_i32_0 = arith.constant 0 : i32
    %c0_i32_1 = arith.constant 0 : i32
    return %arg0, %c0_i32, %c0_i32_0 : i32, i32, i32
  }
  func.func @transform_14(%arg0: i32) -> (i32, i32) {
    %c0_i32 = arith.constant 0 : i32
    %c0_i32_0 = arith.constant 0 : i32
    %c0_i32_1 = arith.constant 0 : i32
    return %c0_i32, %c0_i32_0 : i32, i32
  }
  func.func @transform_15(%arg0: i32) -> (i32, i32) {
    %c0_i32 = arith.constant 0 : i32
    %c0_i32_0 = arith.constant 0 : i32
    %c0_i32_1 = arith.constant 0 : i32
    return %c0_i32, %c0_i32_0 : i32, i32
  }
  func.func @transform_16(%arg0: i32) -> (i32, i32) {
    %c0_i32 = arith.constant 0 : i32
    %c0_i32_0 = arith.constant 0 : i32
    %c0_i32_1 = arith.constant 0 : i32
    return %c0_i32, %c0_i32_0 : i32, i32
  }
}

</mosaic_0001>

<llo_original>
// kernel: tpu_custom_call.1
$region0: #{tpu_custom_call.1}
  #allocation0 [shape = 'u32[]', space=smem, size = 0x4, offset = 0x4, fixed_abs, tag = 'smem constant byte address 0x4 - core index']
  #allocation1 [shape = 'u32[72,128]{1,0:T(1,128)}', space=vmem, size = 0x9000, scoped, tag = 'internal scratch']
  #allocation2 [shape = 'f32[16,32]{1,0:T(8,128)}', space=vmem, size = 0x2000, scoped, tag = 'scratch operand']
  %s0 = inlined_call_operand.vmem [shape: f32[16,32], index: 0, kind: input, shape index: {}]
  %s1 = inlined_call_operand.vmem [shape: f32[2,8,8], index: 1, kind: input, shape index: {}]
  %s2 = inlined_call_operand.vmem [shape: bf16[2,4,32,8], index: 2, kind: input, shape index: {}]
  %s3 = inlined_call_operand.vmem [shape: bf16[2,4,32,8], index: 3, kind: input, shape index: {}]
  %s4 = inlined_call_operand.vmem [shape: bf16[2,4,32,8], index: 4, kind: input, shape index: {}]
  %s5 = inlined_call_operand.vmem [shape: bf16[2,4,8,32], index: 5, kind: input, shape index: {}]
  %s6 = inlined_call_operand.vmem [shape: f32[2,1,32], index: 6, kind: input, shape index: {}]
  %s7 = inlined_call_operand.vmem [shape: f32[2,1,32], index: 7, kind: input, shape index: {}]
  %s8 = inlined_call_operand.vmem [shape: bf16[2,32,64], index: 8, kind: input, shape index: {}]
  %s9 = inlined_call_operand.vmem [shape: f32[2,1,64], index: 9, kind: input, shape index: {}]
  %s10 = inlined_call_operand.vmem [shape: bf16[2,64,32], index: 10, kind: input, shape index: {}]
  %s11 = inlined_call_operand.vmem [shape: f32[2,1,32], index: 11, kind: input, shape index: {}]
  %s12 = inlined_call_operand.vmem [shape: f32[2,1,32], index: 12, kind: input, shape index: {}]
  %s13 = inlined_call_operand.vmem [shape: f32[2,1,32], index: 13, kind: input, shape index: {}]
  %s14 = inlined_call_operand.vmem [shape: bf16[32,32], index: 14, kind: input, shape index: {}]
  %s15 = inlined_call_operand.vmem [shape: f32[1,32], index: 15, kind: input, shape index: {}]
  %s16 = inlined_call_operand.hbm [shape: f32[16,32], index: 16, kind: output, shape index: {}]
  %s17 = sld [smem:[#allocation0]]
  $region105: #{tpu_custom_call.1} parent=0
    _
  %s19 = ssub.s32 1, %s17
  %s20 = scalar_select 0, %s19, %s17
  $region1: #{tpu_custom_call.1} parent=0
    #allocation3 [shape = 'u8[8192]{0}', space=vmem, size = 0x2000, scoped, tag = 'output window, operand 0, single buffered']
    #allocation4 [shape = 's32[2]{0}', space=sflag, size = 0x8, scoped, tag = 'scoped memory for tpu_custom_call.1']
    %21 = vsyncpa [#allocation4], 0
    loop: start=0, step=1, limit=4
    $region2: #{tpu_custom_call.1} parent=1 // loop_pre_header
      _
    $region3: #{tpu_custom_call.1} parent=1 // loop_header
      %s23 = sphi 0, %s27
      %p24 = scmp.ge.s32.totalorder %s23, 4
      %s31 = sphi 0, %s31
      %s33 = sphi 0, %s31
      %s34 = sphi 0, %s33
      %s48 = sphi 0, %s34
      %s52 = sphi 0, %s52
      %s54 = sphi 0, %s52
      %s55 = sphi 0, %s54
      %s69 = sphi 0, %s55
      %s75 = sphi 0, %s77
      %s78 = sphi 0, %s75
      %s79 = sphi 0, %s78
      %s95 = sphi 0, %s79
      %s101 = sphi 0, %s103
      %s104 = sphi 0, %s101
      %s105 = sphi 0, %s104
      %s121 = sphi 0, %s105
      %s127 = sphi 0, %s129
      %s130 = sphi 0, %s127
      %s131 = sphi 0, %s130
      %s147 = sphi 0, %s131
      %s153 = sphi 0, %s155
      %s156 = sphi 0, %s153
      %s157 = sphi 0, %s156
      %s173 = sphi 0, %s157
      %s179 = sphi 0, %s181
      %s182 = sphi 0, %s179
      %s183 = sphi 0, %s182
      %s199 = sphi 0, %s183
      %s205 = sphi 0, %s207
      %s208 = sphi 0, %s205
      %s209 = sphi 0, %s208
      %s225 = sphi 0, %s209
      %s231 = sphi 0, %s233
      %s234 = sphi 0, %s231
      %s235 = sphi 0, %s234
      %s251 = sphi 0, %s235
      %s257 = sphi 0, %s259
      %s260 = sphi 0, %s257
      %s261 = sphi 0, %s260
      %s277 = sphi 0, %s261
      %s283 = sphi 0, %s285
      %s286 = sphi 0, %s283
      %s287 = sphi 0, %s286
      %s303 = sphi 0, %s287
      %s309 = sphi 0, %s311
      %s312 = sphi 0, %s309
      %s313 = sphi 0, %s312
      %s329 = sphi 0, %s313
      %s335 = sphi 0, %s337
      %s338 = sphi 0, %s335
      %s339 = sphi 0, %s338
      %s355 = sphi 0, %s339
      %s361 = sphi 0, %s363
      %s364 = sphi 0, %s361
      %s365 = sphi 0, %s364
      %s381 = sphi 0, %s365
      %s385 = sphi 0, %s385
      %s387 = sphi 0, %s385
      %s388 = sphi 0, %s387
      %s402 = sphi 0, %s388
      %s406 = sphi 0, %s406
      %s408 = sphi 0, %s406
      %s409 = sphi 0, %s408
      %s423 = sphi 0, %s409
      %s427 = sphi 0, %s427
      %s429 = sphi 0, %s427
      %s430 = sphi 0, %s429
      %s444 = sphi 0, %s430
    $region4: #{tpu_custom_call.1} parent=1 // loop_header_branch
      %26 = sbr.rel (%p24) target = $region8
    $region5: #{tpu_custom_call.1} parent=1 // loop_body
      %s28 = ssub.s32 %s23, 1
      %s29 = ssub.s32 %s23, 2
      %s30 = sadd.s32 %s23, 1
      %s32 = sadd.s32 %s31, 1
      %p35 = scmp.eq.s32.totalorder %s23, 1
      %p36 = scmp.ne.s32.totalorder %s31, %s33
      %p37 = scmp.eq.s32.totalorder %s23, 0
      %p38 = por %p36, %p37
      %p39 = scmp.ne.s32.totalorder %s31, %s33
      %p40 = scmp.eq.s32.totalorder %s28, 1
      %p41 = por %p39, %p40
      %p42 = scmp.ne.s32.totalorder %s33, %s34
      %p43 = scmp.eq.s32.totalorder %s28, 0
      %p44 = por %p42, %p43
      %p45 = scmp.ne.s32.totalorder %s33, %s34
      %p46 = scmp.eq.s32.totalorder %s29, 1
      %p47 = por %p45, %p46
      %p49 = scmp.ne.s32.totalorder %s34, %s48
      %p50 = scmp.eq.s32.totalorder %s29, 0
      %p51 = por %p49, %p50
      %s53 = sadd.s32 %s52, 1
      %p56 = scmp.eq.s32.totalorder %s23, 1
      %p57 = scmp.ne.s32.totalorder %s52, %s54
      %p58 = scmp.eq.s32.totalorder %s23, 0
      %p59 = por %p57, %p58
      %p60 = scmp.ne.s32.totalorder %s52, %s54
      %p61 = scmp.eq.s32.totalorder %s28, 1
      %p62 = por %p60, %p61
      %p63 = scmp.ne.s32.totalorder %s54, %s55
      %p64 = scmp.eq.s32.totalorder %s28, 0
      %p65 = por %p63, %p64
      %p66 = scmp.ne.s32.totalorder %s54, %s55
      %p67 = scmp.eq.s32.totalorder %s29, 1
      %p68 = por %p66, %p67
      %p70 = scmp.ne.s32.totalorder %s55, %s69
      %p71 = scmp.eq.s32.totalorder %s29, 0
      %p72 = por %p70, %p71
      %s73 = ssub.s32 %s23, %s30
      %p74 = scmp.eq.s32.totalorder %s73, 0
      %s76 = sadd.s32 %s75, 1
      %s77 = scalar_select %p74, %s75, %s76
      %p80 = pneg %p74
      %p81 = scmp.eq.s32.totalorder %s23, 1
      %p82 = por %p80, %p81
      %p83 = scmp.ne.s32.totalorder %s75, %s78
      %p84 = scmp.eq.s32.totalorder %s23, 0
      %p85 = por %p83, %p84
      %p86 = scmp.ne.s32.totalorder %s75, %s78
      %p87 = scmp.eq.s32.totalorder %s28, 1
      %p88 = por %p86, %p87
      %p89 = scmp.ne.s32.totalorder %s78, %s79
      %p90 = scmp.eq.s32.totalorder %s28, 0
      %p91 = por %p89, %p90
      %p92 = scmp.ne.s32.totalorder %s78, %s79
      %p93 = scmp.eq.s32.totalorder %s29, 1
      %p94 = por %p92, %p93
      %p96 = scmp.ne.s32.totalorder %s79, %s95
      %p97 = scmp.eq.s32.totalorder %s29, 0
      %p98 = por %p96, %p97
      %s99 = ssub.s32 %s23, %s30
      %p100 = scmp.eq.s32.totalorder %s99, 0
      %s102 = sadd.s32 %s101, 1
      %s103 = scalar_select %p100, %s101, %s102
      %p106 = pneg %p100
      %p107 = scmp.eq.s32.totalorder %s23, 1
      %p108 = por %p106, %p107
      %p109 = scmp.ne.s32.totalorder %s101, %s104
      %p110 = scmp.eq.s32.totalorder %s23, 0
      %p111 = por %p109, %p110
      %p112 = scmp.ne.s32.totalorder %s101, %s104
      %p113 = scmp.eq.s32.totalorder %s28, 1
      %p114 = por %p112, %p113
      %p115 = scmp.ne.s32.totalorder %s104, %s105
      %p116 = scmp.eq.s32.totalorder %s28, 0
      %p117 = por %p115, %p116
      %p118 = scmp.ne.s32.totalorder %s104, %s105
      %p119 = scmp.eq.s32.totalorder %s29, 1
      %p120 = por %p118, %p119
      %p122 = scmp.ne.s32.totalorder %s105, %s121
      %p123 = scmp.eq.s32.totalorder %s29, 0
      %p124 = por %p122, %p123
      %s125 = ssub.s32 %s23, %s30
      %p126 = scmp.eq.s32.totalorder %s125, 0
      %s128 = sadd.s32 %s127, 1
      %s129 = scalar_select %p126, %s127, %s128
      %p132 = pneg %p126
      %p133 = scmp.eq.s32.totalorder %s23, 1
      %p134 = por %p132, %p133
      %p135 = scmp.ne.s32.totalorder %s127, %s130
      %p136 = scmp.eq.s32.totalorder %s23, 0
      %p137 = por %p135, %p136
      %p138 = scmp.ne.s32.totalorder %s127, %s130
      %p139 = scmp.eq.s32.totalorder %s28, 1
      %p140 = por %p138, %p139
      %p141 = scmp.ne.s32.totalorder %s130, %s131
      %p142 = scmp.eq.s32.totalorder %s28, 0
      %p143 = por %p141, %p142
      %p144 = scmp.ne.s32.totalorder %s130, %s131
      %p145 = scmp.eq.s32.totalorder %s29, 1
      %p146 = por %p144, %p145
      %p148 = scmp.ne.s32.totalorder %s131, %s147
      %p149 = scmp.eq.s32.totalorder %s29, 0
      %p150 = por %p148, %p149
      %s151 = ssub.s32 %s23, %s30
      %p152 = scmp.eq.s32.totalorder %s151, 0
      %s154 = sadd.s32 %s153, 1
      %s155 = scalar_select %p152, %s153, %s154
      %p158 = pneg %p152
      %p159 = scmp.eq.s32.totalorder %s23, 1
      %p160 = por %p158, %p159
      %p161 = scmp.ne.s32.totalorder %s153, %s156
      %p162 = scmp.eq.s32.totalorder %s23, 0
      %p163 = por %p161, %p162
      %p164 = scmp.ne.s32.totalorder %s153, %s156
      %p165 = scmp.eq.s32.totalorder %s28, 1
      %p166 = por %p164, %p165
      %p167 = scmp.ne.s32.totalorder %s156, %s157
      %p168 = scmp.eq.s32.totalorder %s28, 0
      %p169 = por %p167, %p168
      %p170 = scmp.ne.s32.totalorder %s156, %s157
      %p171 = scmp.eq.s32.totalorder %s29, 1
      %p172 = por %p170, %p171
      %p174 = scmp.ne.s32.totalorder %s157, %s173
      %p175 = scmp.eq.s32.totalorder %s29, 0
      %p176 = por %p174, %p175
      %s177 = ssub.s32 %s23, %s30
      %p178 = scmp.eq.s32.totalorder %s177, 0
      %s180 = sadd.s32 %s179, 1
      %s181 = scalar_select %p178, %s179, %s180
      %p184 = pneg %p178
      %p185 = scmp.eq.s32.totalorder %s23, 1
      %p186 = por %p184, %p185
      %p187 = scmp.ne.s32.totalorder %s179, %s182
      %p188 = scmp.eq.s32.totalorder %s23, 0
      %p189 = por %p187, %p188
      %p190 = scmp.ne.s32.totalorder %s179, %s182
      %p191 = scmp.eq.s32.totalorder %s28, 1
      %p192 = por %p190, %p191
      %p193 = scmp.ne.s32.totalorder %s182, %s183
      %p194 = scmp.eq.s32.totalorder %s28, 0
      %p195 = por %p193, %p194
      %p196 = scmp.ne.s32.totalorder %s182, %s183
      %p197 = scmp.eq.s32.totalorder %s29, 1
      %p198 = por %p196, %p197
      %p200 = scmp.ne.s32.totalorder %s183, %s199
      %p201 = scmp.eq.s32.totalorder %s29, 0
      %p202 = por %p200, %p201
      %s203 = ssub.s32 %s23, %s30
      %p204 = scmp.eq.s32.totalorder %s203, 0
      %s206 = sadd.s32 %s205, 1
      %s207 = scalar_select %p204, %s205, %s206
      %p210 = pneg %p204
      %p211 = scmp.eq.s32.totalorder %s23, 1
      %p212 = por %p210, %p211
      %p213 = scmp.ne.s32.totalorder %s205, %s208
      %p214 = scmp.eq.s32.totalorder %s23, 0
      %p215 = por %p213, %p214
      %p216 = scmp.ne.s32.totalorder %s205, %s208
      %p217 = scmp.eq.s32.totalorder %s28, 1
      %p218 = por %p216, %p217
      %p219 = scmp.ne.s32.totalorder %s208, %s209
      %p220 = scmp.eq.s32.totalorder %s28, 0
      %p221 = por %p219, %p220
      %p222 = scmp.ne.s32.totalorder %s208, %s209
      %p223 = scmp.eq.s32.totalorder %s29, 1
      %p224 = por %p222, %p223
      %p226 = scmp.ne.s32.totalorder %s209, %s225
      %p227 = scmp.eq.s32.totalorder %s29, 0
      %p228 = por %p226, %p227
      %s229 = ssub.s32 %s23, %s30
      %p230 = scmp.eq.s32.totalorder %s229, 0
      %s232 = sadd.s32 %s231, 1
      %s233 = scalar_select %p230, %s231, %s232
      %p236 = pneg %p230
      %p237 = scmp.eq.s32.totalorder %s23, 1
      %p238 = por %p236, %p237
      %p239 = scmp.ne.s32.totalorder %s231, %s234
      %p240 = scmp.eq.s32.totalorder %s23, 0
      %p241 = por %p239, %p240
      %p242 = scmp.ne.s32.totalorder %s231, %s234
      %p243 = scmp.eq.s32.totalorder %s28, 1
      %p244 = por %p242, %p243
      %p245 = scmp.ne.s32.totalorder %s234, %s235
      %p246 = scmp.eq.s32.totalorder %s28, 0
      %p247 = por %p245, %p246
      %p248 = scmp.ne.s32.totalorder %s234, %s235
      %p249 = scmp.eq.s32.totalorder %s29, 1
      %p250 = por %p248, %p249
      %p252 = scmp.ne.s32.totalorder %s235, %s251
      %p253 = scmp.eq.s32.totalorder %s29, 0
      %p254 = por %p252, %p253
      %s255 = ssub.s32 %s23, %s30
      %p256 = scmp.eq.s32.totalorder %s255, 0
      %s258 = sadd.s32 %s257, 1
      %s259 = scalar_select %p256, %s257, %s258
      %p262 = pneg %p256
      %p263 = scmp.eq.s32.totalorder %s23, 1
      %p264 = por %p262, %p263
      %p265 = scmp.ne.s32.totalorder %s257, %s260
      %p266 = scmp.eq.s32.totalorder %s23, 0
      %p267 = por %p265, %p266
      %p268 = scmp.ne.s32.totalorder %s257, %s260
      %p269 = scmp.eq.s32.totalorder %s28, 1
      %p270 = por %p268, %p269
      %p271 = scmp.ne.s32.totalorder %s260, %s261
      %p272 = scmp.eq.s32.totalorder %s28, 0
      %p273 = por %p271, %p272
      %p274 = scmp.ne.s32.totalorder %s260, %s261
      %p275 = scmp.eq.s32.totalorder %s29, 1
      %p276 = por %p274, %p275
      %p278 = scmp.ne.s32.totalorder %s261, %s277
      %p279 = scmp.eq.s32.totalorder %s29, 0
      %p280 = por %p278, %p279
      %s281 = ssub.s32 %s23, %s30
      %p282 = scmp.eq.s32.totalorder %s281, 0
      %s284 = sadd.s32 %s283, 1
      %s285 = scalar_select %p282, %s283, %s284
      %p288 = pneg %p282
      %p289 = scmp.eq.s32.totalorder %s23, 1
      %p290 = por %p288, %p289
      %p291 = scmp.ne.s32.totalorder %s283, %s286
      %p292 = scmp.eq.s32.totalorder %s23, 0
      %p293 = por %p291, %p292
      %p294 = scmp.ne.s32.totalorder %s283, %s286
      %p295 = scmp.eq.s32.totalorder %s28, 1
      %p296 = por %p294, %p295
      %p297 = scmp.ne.s32.totalorder %s286, %s287
      %p298 = scmp.eq.s32.totalorder %s28, 0
      %p299 = por %p297, %p298
      %p300 = scmp.ne.s32.totalorder %s286, %s287
      %p301 = scmp.eq.s32.totalorder %s29, 1
      %p302 = por %p300, %p301
      %p304 = scmp.ne.s32.totalorder %s287, %s303
      %p305 = scmp.eq.s32.totalorder %s29, 0
      %p306 = por %p304, %p305
      %s307 = ssub.s32 %s23, %s30
      %p308 = scmp.eq.s32.totalorder %s307, 0
      %s310 = sadd.s32 %s309, 1
      %s311 = scalar_select %p308, %s309, %s310
      %p314 = pneg %p308
      %p315 = scmp.eq.s32.totalorder %s23, 1
      %p316 = por %p314, %p315
      %p317 = scmp.ne.s32.totalorder %s309, %s312
      %p318 = scmp.eq.s32.totalorder %s23, 0
      %p319 = por %p317, %p318
      %p320 = scmp.ne.s32.totalorder %s309, %s312
      %p321 = scmp.eq.s32.totalorder %s28, 1
      %p322 = por %p320, %p321
      %p323 = scmp.ne.s32.totalorder %s312, %s313
      %p324 = scmp.eq.s32.totalorder %s28, 0
      %p325 = por %p323, %p324
      %p326 = scmp.ne.s32.totalorder %s312, %s313
      %p327 = scmp.eq.s32.totalorder %s29, 1
      %p328 = por %p326, %p327
      %p330 = scmp.ne.s32.totalorder %s313, %s329
      %p331 = scmp.eq.s32.totalorder %s29, 0
      %p332 = por %p330, %p331
      %s333 = ssub.s32 %s23, %s30
      %p334 = scmp.eq.s32.totalorder %s333, 0
      %s336 = sadd.s32 %s335, 1
      %s337 = scalar_select %p334, %s335, %s336
      %p340 = pneg %p334
      %p341 = scmp.eq.s32.totalorder %s23, 1
      %p342 = por %p340, %p341
      %p343 = scmp.ne.s32.totalorder %s335, %s338
      %p344 = scmp.eq.s32.totalorder %s23, 0
      %p345 = por %p343, %p344
      %p346 = scmp.ne.s32.totalorder %s335, %s338
      %p347 = scmp.eq.s32.totalorder %s28, 1
      %p348 = por %p346, %p347
      %p349 = scmp.ne.s32.totalorder %s338, %s339
      %p350 = scmp.eq.s32.totalorder %s28, 0
      %p351 = por %p349, %p350
      %p352 = scmp.ne.s32.totalorder %s338, %s339
      %p353 = scmp.eq.s32.totalorder %s29, 1
      %p354 = por %p352, %p353
      %p356 = scmp.ne.s32.totalorder %s339, %s355
      %p357 = scmp.eq.s32.totalorder %s29, 0
      %p358 = por %p356, %p357
      %s359 = ssub.s32 %s23, %s30
      %p360 = scmp.eq.s32.totalorder %s359, 0
      %s362 = sadd.s32 %s361, 1
      %s363 = scalar_select %p360, %s361, %s362
      %p366 = pneg %p360
      %p367 = scmp.eq.s32.totalorder %s23, 1
      %p368 = por %p366, %p367
      %p369 = scmp.ne.s32.totalorder %s361, %s364
      %p370 = scmp.eq.s32.totalorder %s23, 0
      %p371 = por %p369, %p370
      %p372 = scmp.ne.s32.totalorder %s361, %s364
      %p373 = scmp.eq.s32.totalorder %s28, 1
      %p374 = por %p372, %p373
      %p375 = scmp.ne.s32.totalorder %s364, %s365
      %p376 = scmp.eq.s32.totalorder %s28, 0
      %p377 = por %p375, %p376
      %p378 = scmp.ne.s32.totalorder %s364, %s365
      %p379 = scmp.eq.s32.totalorder %s29, 1
      %p380 = por %p378, %p379
      %p382 = scmp.ne.s32.totalorder %s365, %s381
      %p383 = scmp.eq.s32.totalorder %s29, 0
      %p384 = por %p382, %p383
      %s386 = sadd.s32 %s385, 1
      %p389 = scmp.eq.s32.totalorder %s23, 1
      %p390 = scmp.ne.s32.totalorder %s385, %s387
      %p391 = scmp.eq.s32.totalorder %s23, 0
      %p392 = por %p390, %p391
      %p393 = scmp.ne.s32.totalorder %s385, %s387
      %p394 = scmp.eq.s32.totalorder %s28, 1
      %p395 = por %p393, %p394
      %p396 = scmp.ne.s32.totalorder %s387, %s388
      %p397 = scmp.eq.s32.totalorder %s28, 0
      %p398 = por %p396, %p397
      %p399 = scmp.ne.s32.totalorder %s387, %s388
      %p400 = scmp.eq.s32.totalorder %s29, 1
      %p401 = por %p399, %p400
      %p403 = scmp.ne.s32.totalorder %s388, %s402
      %p404 = scmp.eq.s32.totalorder %s29, 0
      %p405 = por %p403, %p404
      %s407 = sadd.s32 %s406, 1
      %p410 = scmp.eq.s32.totalorder %s23, 1
      %p411 = scmp.ne.s32.totalorder %s406, %s408
      %p412 = scmp.eq.s32.totalorder %s23, 0
      %p413 = por %p411, %p412
      %p414 = scmp.ne.s32.totalorder %s406, %s408
      %p415 = scmp.eq.s32.totalorder %s28, 1
      %p416 = por %p414, %p415
      %p417 = scmp.ne.s32.totalorder %s408, %s409
      %p418 = scmp.eq.s32.totalorder %s28, 0
      %p419 = por %p417, %p418
      %p420 = scmp.ne.s32.totalorder %s408, %s409
      %p421 = scmp.eq.s32.totalorder %s29, 1
      %p422 = por %p420, %p421
      %p424 = scmp.ne.s32.totalorder %s409, %s423
      %p425 = scmp.eq.s32.totalorder %s29, 0
      %p426 = por %p424, %p425
      %s428 = sadd.s32 %s427, 1
      %p431 = scmp.eq.s32.totalorder %s23, 1
      %p432 = scmp.ne.s32.totalorder %s427, %s429
      %p433 = scmp.eq.s32.totalorder %s23, 0
      %p434 = por %p432, %p433
      %p435 = scmp.ne.s32.totalorder %s427, %s429
      %p436 = scmp.eq.s32.totalorder %s28, 1
      %p437 = por %p435, %p436
      %p438 = scmp.ne.s32.totalorder %s429, %s430
      %p439 = scmp.eq.s32.totalorder %s28, 0
      %p440 = por %p438, %p439
      %p441 = scmp.ne.s32.totalorder %s429, %s430
      %p442 = scmp.eq.s32.totalorder %s29, 1
      %p443 = por %p441, %p442
      %p445 = scmp.ne.s32.totalorder %s430, %s444
      %p446 = scmp.eq.s32.totalorder %s29, 0
      %p447 = por %p445, %p446
      %p448 = scmp.le.s32.totalorder 1, %s23
      %p449 = scmp.lt.s32.totalorder %s23, 3
      %p450 = pnand %p448, %p449
      %p451 = pneg %p450
      // Predicated region
      $region9: #{tpu_custom_call.1} parent=5 // pred_check
        _
      $region10: #{tpu_custom_call.1} parent=5 // pred_check_branch
        %453 = sbr.rel (%p450) target = $region12
      $region11: #{tpu_custom_call.1} parent=5 // pred_region
        %s454 = ssub.s32 %s23, 1
        // Predicated region
        $region13: #{tpu_custom_call.1} parent=11 // pred_check
          %p455 = pneg %p44
        $region14: #{tpu_custom_call.1} parent=11 // pred_check_branch
          %457 = sbr.rel (%p455) target = $region16
        $region15: #{tpu_custom_call.1} parent=11 // pred_region
          _
        $region16: #{tpu_custom_call.1} parent=11 // pred_fallthru
          _
        // Predicated region
        $region17: #{tpu_custom_call.1} parent=11 // pred_check
          %p458 = pneg %p65
        $region18: #{tpu_custom_call.1} parent=11 // pred_check_branch
          %460 = sbr.rel (%p458) target = $region20
        $region19: #{tpu_custom_call.1} parent=11 // pred_region
          _
        $region20: #{tpu_custom_call.1} parent=11 // pred_fallthru
          _
        // Predicated region
        $region21: #{tpu_custom_call.1} parent=11 // pred_check
          %p461 = pneg %p398
        $region22: #{tpu_custom_call.1} parent=11 // pred_check_branch
          %463 = sbr.rel (%p461) target = $region24
        $region23: #{tpu_custom_call.1} parent=11 // pred_region
          _
        $region24: #{tpu_custom_call.1} parent=11 // pred_fallthru
          _
        // Predicated region
        $region25: #{tpu_custom_call.1} parent=11 // pred_check
          %p464 = pneg %p419
        $region26: #{tpu_custom_call.1} parent=11 // pred_check_branch
          %466 = sbr.rel (%p464) target = $region28
        $region27: #{tpu_custom_call.1} parent=11 // pred_region
          _
        $region28: #{tpu_custom_call.1} parent=11 // pred_fallthru
          _
      $region12: #{tpu_custom_call.1} parent=5 // pred_fallthru
        _
      %p467 = scmp.lt.s32.totalorder %s23, 2
      // Predicated region
      $region29: #{tpu_custom_call.1} parent=5 // pred_check
        %p468 = pneg %p467
      $region30: #{tpu_custom_call.1} parent=5 // pred_check_branch
        %470 = sbr.rel (%p468) target = $region32
      $region31: #{tpu_custom_call.1} parent=5 // pred_region
        // Predicated region
        $region33: #{tpu_custom_call.1} parent=31 // pred_check
          %p471 = pneg %p85
        $region34: #{tpu_custom_call.1} parent=31 // pred_check_branch
          %473 = sbr.rel (%p471) target = $region36
        $region35: #{tpu_custom_call.1} parent=31 // pred_region
          %p474 = scmp.lt.s32.totalorder %s23, 1
          %s475 = scalar_select %p474, %s23, 1
          %s476 = smul.addr %s475, 16
          %s477 = smul.addr %s476, 4
          %s478 = scalar_lea.vmem %s2, %s477
        $region36: #{tpu_custom_call.1} parent=31 // pred_fallthru
          _
        // Predicated region
        $region37: #{tpu_custom_call.1} parent=31 // pred_check
          %p479 = pneg %p111
        $region38: #{tpu_custom_call.1} parent=31 // pred_check_branch
          %481 = sbr.rel (%p479) target = $region40
        $region39: #{tpu_custom_call.1} parent=31 // pred_region
          %p482 = scmp.lt.s32.totalorder %s23, 1
          %s483 = scalar_select %p482, %s23, 1
          %s484 = smul.addr %s483, 16
          %s485 = smul.addr %s484, 4
          %s486 = scalar_lea.vmem %s3, %s485
        $region40: #{tpu_custom_call.1} parent=31 // pred_fallthru
          _
        // Predicated region
        $region41: #{tpu_custom_call.1} parent=31 // pred_check
          %p487 = pneg %p137
        $region42: #{tpu_custom_call.1} parent=31 // pred_check_branch
          %489 = sbr.rel (%p487) target = $region44
        $region43: #{tpu_custom_call.1} parent=31 // pred_region
          %p490 = scmp.lt.s32.totalorder %s23, 1
          %s491 = scalar_select %p490, %s23, 1
          %s492 = smul.addr %s491, 16
          %s493 = smul.addr %s492, 4
          %s494 = scalar_lea.vmem %s4, %s493
        $region44: #{tpu_custom_call.1} parent=31 // pred_fallthru
          _
        // Predicated region
        $region45: #{tpu_custom_call.1} parent=31 // pred_check
          %p495 = pneg %p163
        $region46: #{tpu_custom_call.1} parent=31 // pred_check_branch
          %497 = sbr.rel (%p495) target = $region48
        $region47: #{tpu_custom_call.1} parent=31 // pred_region
          %p498 = scmp.lt.s32.totalorder %s23, 1
          %s499 = scalar_select %p498, %s23, 1
          %s500 = smul.addr %s499, 4
          %s501 = smul.addr %s500, 4
          %s502 = scalar_lea.vmem %s5, %s501
        $region48: #{tpu_custom_call.1} parent=31 // pred_fallthru
          _
        // Predicated region
        $region49: #{tpu_custom_call.1} parent=31 // pred_check
          %p503 = pneg %p189
        $region50: #{tpu_custom_call.1} parent=31 // pred_check_branch
          %505 = sbr.rel (%p503) target = $region52
        $region51: #{tpu_custom_call.1} parent=31 // pred_region
          %p506 = scmp.lt.s32.totalorder %s23, 1
          %s507 = scalar_select %p506, %s23, 1
          %s508 = scalar_lea.vmem %s6, %s507
        $region52: #{tpu_custom_call.1} parent=31 // pred_fallthru
          _
        // Predicated region
        $region53: #{tpu_custom_call.1} parent=31 // pred_check
          %p509 = pneg %p215
        $region54: #{tpu_custom_call.1} parent=31 // pred_check_branch
          %511 = sbr.rel (%p509) target = $region56
        $region55: #{tpu_custom_call.1} parent=31 // pred_region
          %p512 = scmp.lt.s32.totalorder %s23, 1
          %s513 = scalar_select %p512, %s23, 1
          %s514 = scalar_lea.vmem %s7, %s513
        $region56: #{tpu_custom_call.1} parent=31 // pred_fallthru
          _
        // Predicated region
        $region57: #{tpu_custom_call.1} parent=31 // pred_check
          %p515 = pneg %p241
        $region58: #{tpu_custom_call.1} parent=31 // pred_check_branch
          %517 = sbr.rel (%p515) target = $region60
        $region59: #{tpu_custom_call.1} parent=31 // pred_region
          %p518 = scmp.lt.s32.totalorder %s23, 1
          %s519 = scalar_select %p518, %s23, 1
          %s520 = smul.addr %s519, 4
          %s521 = smul.addr %s520, 4
          %s522 = scalar_lea.vmem %s8, %s521
        $region60: #{tpu_custom_call.1} parent=31 // pred_fallthru
          _
        // Predicated region
        $region61: #{tpu_custom_call.1} parent=31 // pred_check
          %p523 = pneg %p267
        $region62: #{tpu_custom_call.1} parent=31 // pred_check_branch
          %525 = sbr.rel (%p523) target = $region64
        $region63: #{tpu_custom_call.1} parent=31 // pred_region
          %p526 = scmp.lt.s32.totalorder %s23, 1
          %s527 = scalar_select %p526, %s23, 1
          %s528 = scalar_lea.vmem %s9, %s527
        $region64: #{tpu_custom_call.1} parent=31 // pred_fallthru
          _
        // Predicated region
        $region65: #{tpu_custom_call.1} parent=31 // pred_check
          %p529 = pneg %p293
        $region66: #{tpu_custom_call.1} parent=31 // pred_check_branch
          %531 = sbr.rel (%p529) target = $region68
        $region67: #{tpu_custom_call.1} parent=31 // pred_region
          %p532 = scmp.lt.s32.totalorder %s23, 1
          %s533 = scalar_select %p532, %s23, 1
          %s534 = smul.addr %s533, 8
          %s535 = smul.addr %s534, 4
          %s536 = scalar_lea.vmem %s10, %s535
        $region68: #{tpu_custom_call.1} parent=31 // pred_fallthru
          _
        // Predicated region
        $region69: #{tpu_custom_call.1} parent=31 // pred_check
          %p537 = pneg %p319
        $region70: #{tpu_custom_call.1} parent=31 // pred_check_branch
          %539 = sbr.rel (%p537) target = $region72
        $region71: #{tpu_custom_call.1} parent=31 // pred_region
          %p540 = scmp.lt.s32.totalorder %s23, 1
          %s541 = scalar_select %p540, %s23, 1
          %s542 = scalar_lea.vmem %s11, %s541
        $region72: #{tpu_custom_call.1} parent=31 // pred_fallthru
          _
        // Predicated region
        $region73: #{tpu_custom_call.1} parent=31 // pred_check
          %p543 = pneg %p345
        $region74: #{tpu_custom_call.1} parent=31 // pred_check_branch
          %545 = sbr.rel (%p543) target = $region76
        $region75: #{tpu_custom_call.1} parent=31 // pred_region
          %p546 = scmp.lt.s32.totalorder %s23, 1
          %s547 = scalar_select %p546, %s23, 1
          %s548 = scalar_lea.vmem %s12, %s547
        $region76: #{tpu_custom_call.1} parent=31 // pred_fallthru
          _
        // Predicated region
        $region77: #{tpu_custom_call.1} parent=31 // pred_check
          %p549 = pneg %p371
        $region78: #{tpu_custom_call.1} parent=31 // pred_check_branch
          %551 = sbr.rel (%p549) target = $region80
        $region79: #{tpu_custom_call.1} parent=31 // pred_region
          %p552 = scmp.lt.s32.totalorder %s23, 1
          %s553 = scalar_select %p552, %s23, 1
          %s554 = scalar_lea.vmem %s13, %s553
        $region80: #{tpu_custom_call.1} parent=31 // pred_fallthru
          _
      $region32: #{tpu_custom_call.1} parent=5 // pred_fallthru
        _
      %p555 = scmp.le.s32.totalorder 1, %s23
      %p556 = scmp.lt.s32.totalorder %s23, 3
      %p557 = pnand %p555, %p556
      %p558 = pneg %p557
      // Predicated region
      $region81: #{tpu_custom_call.1} parent=5 // pred_check
        _
      $region82: #{tpu_custom_call.1} parent=5 // pred_check_branch
        %560 = sbr.rel (%p557) target = $region84
      $region83: #{tpu_custom_call.1} parent=5 // pred_region
        %s561 = ssub.s32 %s23, 1
        %p562 = pneg %p44
        %p563 = pneg %p41
        %p564 = pneg %p65
        %p565 = pneg %p62
        %p566 = scmp.lt.s32.totalorder %s28, 1
        %s567 = scalar_select %p566, %s28, 1
        %s568 = smul.addr %s567, 16
        %s569 = smul.addr %s568, 4
        %s570 = scalar_lea.vmem %s2, %s569
        %p571 = pneg %p91
        %p572 = pneg %p88
        %p573 = scmp.lt.s32.totalorder %s28, 1
        %s574 = scalar_select %p573, %s28, 1
        %s575 = smul.addr %s574, 16
        %s576 = smul.addr %s575, 4
        %s577 = scalar_lea.vmem %s3, %s576
        %p578 = pneg %p117
        %p579 = pneg %p114
        %p580 = scmp.lt.s32.totalorder %s28, 1
        %s581 = scalar_select %p580, %s28, 1
        %s582 = smul.addr %s581, 16
        %s583 = smul.addr %s582, 4
        %s584 = scalar_lea.vmem %s4, %s583
        %p585 = pneg %p143
        %p586 = pneg %p140
        %p587 = scmp.lt.s32.totalorder %s28, 1
        %s588 = scalar_select %p587, %s28, 1
        %s589 = smul.addr %s588, 4
        %s590 = smul.addr %s589, 4
        %s591 = scalar_lea.vmem %s5, %s590
        %p592 = pneg %p169
        %p593 = pneg %p166
        %p594 = scmp.lt.s32.totalorder %s28, 1
        %s595 = scalar_select %p594, %s28, 1
        %s596 = scalar_lea.vmem %s6, %s595
        %p597 = pneg %p195
        %p598 = pneg %p192
        %p599 = scmp.lt.s32.totalorder %s28, 1
        %s600 = scalar_select %p599, %s28, 1
        %s601 = scalar_lea.vmem %s7, %s600
        %p602 = pneg %p221
        %p603 = pneg %p218
        %p604 = scmp.lt.s32.totalorder %s28, 1
        %s605 = scalar_select %p604, %s28, 1
        %s606 = smul.addr %s605, 4
        %s607 = smul.addr %s606, 4
        %s608 = scalar_lea.vmem %s8, %s607
        %p609 = pneg %p247
        %p610 = pneg %p244
        %p611 = scmp.lt.s32.totalorder %s28, 1
        %s612 = scalar_select %p611, %s28, 1
        %s613 = scalar_lea.vmem %s9, %s612
        %p614 = pneg %p273
        %p615 = pneg %p270
        %p616 = scmp.lt.s32.totalorder %s28, 1
        %s617 = scalar_select %p616, %s28, 1
        %s618 = smul.addr %s617, 8
        %s619 = smul.addr %s618, 4
        %s620 = scalar_lea.vmem %s10, %s619
        %p621 = pneg %p299
        %p622 = pneg %p296
        %p623 = scmp.lt.s32.totalorder %s28, 1
        %s624 = scalar_select %p623, %s28, 1
        %s625 = scalar_lea.vmem %s11, %s624
        %p626 = pneg %p325
        %p627 = pneg %p322
        %p628 = scmp.lt.s32.totalorder %s28, 1
        %s629 = scalar_select %p628, %s28, 1
        %s630 = scalar_lea.vmem %s12, %s629
        %p631 = pneg %p351
        %p632 = pneg %p348
        %p633 = scmp.lt.s32.totalorder %s28, 1
        %s634 = scalar_select %p633, %s28, 1
        %s635 = scalar_lea.vmem %s13, %s634
        %p636 = pneg %p377
        %p637 = pneg %p374
        %p638 = pneg %p398
        %p639 = pneg %p395
        %p640 = pneg %p419
        %p641 = pneg %p416
        %p642 = pneg %p440
        %p643 = pneg %p437
        %p644 = scmp.lt.s32.totalorder %s28, 1
        %s645 = scalar_select %p644, %s28, 1
        %s646 = smul.addr %s645, 16
        %s647 = smul.addr %s646, 4
        %s648 = scalar_lea.vmem %s2, %s647
        %p649 = scmp.lt.s32.totalorder %s28, 1
        %s650 = scalar_select %p649, %s28, 1
        %s651 = smul.addr %s650, 16
        %s652 = smul.addr %s651, 4
        %s653 = scalar_lea.vmem %s3, %s652
        %p654 = scmp.lt.s32.totalorder %s28, 1
        %s655 = scalar_select %p654, %s28, 1
        %s656 = smul.addr %s655, 16
        %s657 = smul.addr %s656, 4
        %s658 = scalar_lea.vmem %s4, %s657
        %p659 = scmp.lt.s32.totalorder %s28, 1
        %s660 = scalar_select %p659, %s28, 1
        %s661 = smul.addr %s660, 4
        %s662 = smul.addr %s661, 4
        %s663 = scalar_lea.vmem %s5, %s662
        %p664 = scmp.lt.s32.totalorder %s28, 1
        %s665 = scalar_select %p664, %s28, 1
        %s666 = scalar_lea.vmem %s6, %s665
        %p667 = scmp.lt.s32.totalorder %s28, 1
        %s668 = scalar_select %p667, %s28, 1
        %s669 = scalar_lea.vmem %s7, %s668
        %p670 = scmp.lt.s32.totalorder %s28, 1
        %s671 = scalar_select %p670, %s28, 1
        %s672 = smul.addr %s671, 4
        %s673 = smul.addr %s672, 4
        %s674 = scalar_lea.vmem %s8, %s673
        %p675 = scmp.lt.s32.totalorder %s28, 1
        %s676 = scalar_select %p675, %s28, 1
        %s677 = scalar_lea.vmem %s9, %s676
        %p678 = scmp.lt.s32.totalorder %s28, 1
        %s679 = scalar_select %p678, %s28, 1
        %s680 = smul.addr %s679, 8
        %s681 = smul.addr %s680, 4
        %s682 = scalar_lea.vmem %s10, %s681
        %p683 = scmp.lt.s32.totalorder %s28, 1
        %s684 = scalar_select %p683, %s28, 1
        %s685 = scalar_lea.vmem %s11, %s684
        %p686 = scmp.lt.s32.totalorder %s28, 1
        %s687 = scalar_select %p686, %s28, 1
        %s688 = scalar_lea.vmem %s12, %s687
        %p689 = scmp.lt.s32.totalorder %s28, 1
        %s690 = scalar_select %p689, %s28, 1
        %s691 = scalar_lea.vmem %s13, %s690
        %p693 = scmp.eq.s32.totalorder %s28, 0
        // Predicated region
        $region85: #{tpu_custom_call.1} parent=83 // pred_check
          %p694 = pneg %p693
        $region86: #{tpu_custom_call.1} parent=83 // pred_check_branch
          %696 = sbr.rel (%p694) target = $region88
        $region87: #{tpu_custom_call.1} parent=83 // pred_region
          %v697 = vld [vmem:[%s0] sm:$0xff]
          %v698 = vld [vmem:[%s0 + $0x8] sm:$0xff]
          %vm699 = vcmask 261120
          %700 = vst.msk [vmem:[#allocation2] sm:$0xff] %vm699, %v697
          %701 = vst.msk [vmem:[#allocation2 + $0x8] sm:$0xff] %vm699, %v698
        $region88: #{tpu_custom_call.1} parent=83 // pred_fallthru
          _
        %v702 = vld [vmem:[#allocation2] sm:$0xff]
        %v703 = vld [vmem:[#allocation2 + $0x8] sm:$0xff]
        %v704 = vpack.c.bf16 %v703, %v702
        %v705 = vld [vmem:[%s1] sm:$0xff]
        %v706 = vld [vmem:[%s1 + $0x8] sm:$0xff]
        %vm707 = vcmp.gt.f32.partialorder %v705, 0.5
        %vm708 = vcmp.gt.f32.partialorder %v706, 0.5
        %v709 = vld [vmem:[%s648] sm:$0xf]
        %v710 = vld [vmem:[%s648 + $0x4] sm:$0xf]
        %v711 = vld [vmem:[%s648 + $0x8] sm:$0xf]
        %v712 = vld [vmem:[%s648 + $0xc] sm:$0xf]
        %v717 = vunpack.c.l.b16 %v709
        %v718 = vunpack.c.l.b16 %v710
        %v719 = vunpack.c.l.b16 %v711
        %v720 = vunpack.c.l.b16 %v712
        %v721 = vpack.c.b16 %v718, %v717
        %v722 = vpack.c.b16 %v720, %v719
        %vm725 = vcmask 261120
        %v727 = vsel %vm725, %v704, 0
        %729 = vmatpush.bf16.msra.mxu0 0
        %730 = vmatpush.bf16.msra.mxu0 0
        %731 = vmatpush.bf16.msra.mxu0 0
        %732 = vmatpush.bf16.msra.mxu0 0
        %733 = vmatpush.bf16.msra.mxu0 0
        %734 = vmatpush.bf16.msra.mxu0 0
        %735 = vmatpush.bf16.msra.mxu0 %v722
        %736 = vmatpush.bf16.msra.mxu0 %v721
        %737 = vmatmul.bf16.gmra.mxu0 %v727
        %v738 = vpop.f32.mrf.mxu0
        %v739 = vadd.f32 0.0, %v738
        %v740 = vpop.f32.mrf.mxu0
        %v741 = vadd.f32 0.0, %v740
        %742 = vdwg.mxu0
        %v743 = vld [vmem:[%s653] sm:$0xf]
        %v744 = vld [vmem:[%s653 + $0x4] sm:$0xf]
        %v745 = vld [vmem:[%s653 + $0x8] sm:$0xf]
        %v746 = vld [vmem:[%s653 + $0xc] sm:$0xf]
        %v751 = vunpack.c.l.b16 %v743
        %v752 = vunpack.c.l.b16 %v744
        %v753 = vunpack.c.l.b16 %v745
        %v754 = vunpack.c.l.b16 %v746
        %v755 = vpack.c.b16 %v752, %v751
        %v756 = vpack.c.b16 %v754, %v753
        %759 = vmatpush.bf16.msra.mxu0 0
        %760 = vmatpush.bf16.msra.mxu0 0
        %761 = vmatpush.bf16.msra.mxu0 0
        %762 = vmatpush.bf16.msra.mxu0 0
        %763 = vmatpush.bf16.msra.mxu0 0
        %764 = vmatpush.bf16.msra.mxu0 0
        %765 = vmatpush.bf16.msra.mxu0 %v756
        %766 = vmatpush.bf16.msra.mxu0 %v755
        %767 = vmatmul.bf16.gmra.mxu0 %v727
        %v768 = vpop.f32.mrf.mxu0
        %v769 = vadd.f32 0.0, %v768
        %v770 = vpop.f32.mrf.mxu0
        %v771 = vadd.f32 0.0, %v770
        %772 = vdwg.mxu0
        %v773 = vld [vmem:[%s658] sm:$0xf]
        %v774 = vld [vmem:[%s658 + $0x4] sm:$0xf]
        %v775 = vld [vmem:[%s658 + $0x8] sm:$0xf]
        %v776 = vld [vmem:[%s658 + $0xc] sm:$0xf]
        %v781 = vunpack.c.l.b16 %v773
        %v782 = vunpack.c.l.b16 %v774
        %v783 = vunpack.c.l.b16 %v775
        %v784 = vunpack.c.l.b16 %v776
        %v785 = vpack.c.b16 %v782, %v781
        %v786 = vpack.c.b16 %v784, %v783
        %789 = vmatpush.bf16.msra.mxu0 0
        %790 = vmatpush.bf16.msra.mxu0 0
        %791 = vmatpush.bf16.msra.mxu0 0
        %792 = vmatpush.bf16.msra.mxu0 0
        %793 = vmatpush.bf16.msra.mxu0 0
        %794 = vmatpush.bf16.msra.mxu0 0
        %795 = vmatpush.bf16.msra.mxu0 %v786
        %796 = vmatpush.bf16.msra.mxu0 %v785
        %797 = vmatmul.bf16.gmra.mxu0 %v727
        %v798 = vpop.f32.mrf.mxu0
        %v799 = vadd.f32 0.0, %v798
        %v800 = vpop.f32.mrf.mxu0
        %v801 = vadd.f32 0.0, %v800
        %802 = vdwg.mxu0
        %v803 = vpack.c.bf16 %v739, %v739
        %v804 = vpack.c.bf16 %v741, %v741
        %v805 = vpack.c.bf16 %v769, %v769
        %v806 = vpack.c.bf16 %v771, %v771
        %v807 = vpack.c.bf16 %v799, %v799
        %v808 = vpack.c.bf16 %v801, %v801
        %vm809 = vcmask 64512
        %v811 = vsel %vm809, %v803, 0
        %v814 = vsel %vm809, %v805, 0
        %816 = vmatpush.bf16.xpose.msra.mxu0 0
        %817 = vmatpush.bf16.xpose.msra.mxu0 0
        %818 = vmatpush.bf16.xpose.msra.mxu0 0
        %819 = vmatpush.bf16.xpose.msra.mxu0 0
        %820 = vmatpush.bf16.xpose.msra.mxu0 0
        %821 = vmatpush.bf16.xpose.msra.mxu0 0
        %822 = vmatpush.bf16.xpose.msra.mxu0 0
        %823 = vmatpush.bf16.xpose.msra.mxu0 %v814
        %824 = vmatmul.bf16.gmra.mxu0 %v811
        %v825 = vpop.f32.mrf.mxu0
        %v826 = vadd.f32 0.0, %v825
        %v827 = vpop.f32.mrf.mxu0
        %828 = vdwg.mxu0
        %v830 = vsel %vm809, %v804, 0
        %v833 = vsel %vm809, %v806, 0
        %835 = vmatpush.bf16.xpose.msra.mxu0 0
        %836 = vmatpush.bf16.xpose.msra.mxu0 0
        %837 = vmatpush.bf16.xpose.msra.mxu0 0
        %838 = vmatpush.bf16.xpose.msra.mxu0 0
        %839 = vmatpush.bf16.xpose.msra.mxu0 0
        %840 = vmatpush.bf16.xpose.msra.mxu0 0
        %841 = vmatpush.bf16.xpose.msra.mxu0 0
        %842 = vmatpush.bf16.xpose.msra.mxu0 %v833
        %843 = vmatmul.bf16.gmra.mxu0 %v830
        %v844 = vpop.f32.mrf.mxu0
        %v845 = vadd.f32 0.0, %v844
        %v846 = vpop.f32.mrf.mxu0
        %847 = vdwg.mxu0
        %v848 = vsel %vm707, %v826, -1000000.0
        %v849 = vsel %vm708, %v845, -1000000.0
        %v850 = vsel %vm809, %v848, -inf
        %851 = vmax.xlane.f32.xlu0 %v850
        %v852 = vpop.xlane.xlu0 %851
        %v853 = vsel %vm809, %v849, -inf
        %854 = vmax.xlane.f32.xlu0 %v853
        %v855 = vpop.xlane.xlu0 %854
        %v856 = vsub.f32 %v848, %v852
        %v857 = vsub.f32 %v849, %v855
        %v858 = vmul.f32 %v856, 1.442695
        %v859 = vpow.pop %v858
        %v860 = vmul.f32 %v857, 1.442695
        %v861 = vpow.pop %v860
        %v862 = vsel %vm809, %v859, 0.0
        %863 = vadd.xlane.f32.xlu0 %v862
        %v864 = vpop.xlane.xlu0 %863
        %v865 = vsel %vm809, %v861, 0.0
        %866 = vadd.xlane.f32.xlu0 %v865
        %v867 = vpop.xlane.xlu0 %866
        %v868 = vrcp.pop %v864
        %v869 = vrcp.pop %v867
        %v870 = vmul.f32 %v859, %v868
        %v871 = vmul.f32 %v861, %v869
        %v872 = vpack.c.bf16 %v870, %v870
        %v873 = vpack.c.bf16 %v871, %v871
        %v875 = vsel %vm809, %v872, 0
        %vm877 = vcmask 1043456
        %v879 = vsel %vm877, %v807, 0
        %881 = vmatpush.bf16.msra.mxu0 0
        %882 = vmatpush.bf16.msra.mxu0 0
        %883 = vmatpush.bf16.msra.mxu0 0
        %884 = vmatpush.bf16.msra.mxu0 0
        %885 = vmatpush.bf16.msra.mxu0 0
        %886 = vmatpush.bf16.msra.mxu0 0
        %887 = vmatpush.bf16.msra.mxu0 0
        %888 = vmatpush.bf16.msra.mxu0 %v879
        %889 = vmatmul.bf16.gmra.mxu0 %v875
        %v890 = vpop.f32.mrf.mxu0
        %v891 = vadd.f32 0.0, %v890
        %v892 = vpop.f32.mrf.mxu0
        %893 = vdwg.mxu0
        %v895 = vsel %vm809, %v873, 0
        %v898 = vsel %vm877, %v808, 0
        %900 = vmatpush.bf16.msra.mxu0 0
        %901 = vmatpush.bf16.msra.mxu0 0
        %902 = vmatpush.bf16.msra.mxu0 0
        %903 = vmatpush.bf16.msra.mxu0 0
        %904 = vmatpush.bf16.msra.mxu0 0
        %905 = vmatpush.bf16.msra.mxu0 0
        %906 = vmatpush.bf16.msra.mxu0 0
        %907 = vmatpush.bf16.msra.mxu0 %v898
        %908 = vmatmul.bf16.gmra.mxu0 %v895
        %v909 = vpop.f32.mrf.mxu0
        %v910 = vadd.f32 0.0, %v909
        %v911 = vpop.f32.mrf.mxu0
        %912 = vdwg.mxu0
        %v913 = vpack.c.bf16 %v910, %v891
        %v914 = vld [vmem:[%s663] sm:$0xf]
        %s915 = scalar_lea.vmem %s648, 16
        %v916 = vld [vmem:[%s915] sm:$0xf]
        %v917 = vld [vmem:[%s915 + $0x4] sm:$0xf]
        %v918 = vld [vmem:[%s915 + $0x8] sm:$0xf]
        %v919 = vld [vmem:[%s915 + $0xc] sm:$0xf]
        %v924 = vunpack.c.l.b16 %v916
        %v925 = vunpack.c.l.b16 %v917
        %v926 = vunpack.c.l.b16 %v918
        %v927 = vunpack.c.l.b16 %v919
        %v928 = vpack.c.b16 %v925, %v924
        %v929 = vpack.c.b16 %v927, %v926
        %932 = vmatpush.bf16.msra.mxu0 0
        %933 = vmatpush.bf16.msra.mxu0 0
        %934 = vmatpush.bf16.msra.mxu0 0
        %935 = vmatpush.bf16.msra.mxu0 0
        %936 = vmatpush.bf16.msra.mxu0 0
        %937 = vmatpush.bf16.msra.mxu0 0
        %938 = vmatpush.bf16.msra.mxu0 %v929
        %939 = vmatpush.bf16.msra.mxu0 %v928
        %940 = vmatmul.bf16.gmra.mxu0 %v727
        %v941 = vpop.f32.mrf.mxu0
        %v942 = vadd.f32 0.0, %v941
        %v943 = vpop.f32.mrf.mxu0
        %v944 = vadd.f32 0.0, %v943
        %945 = vdwg.mxu0
        %s946 = scalar_lea.vmem %s653, 16
        %v947 = vld [vmem:[%s946] sm:$0xf]
        %v948 = vld [vmem:[%s946 + $0x4] sm:$0xf]
        %v949 = vld [vmem:[%s946 + $0x8] sm:$0xf]
        %v950 = vld [vmem:[%s946 + $0xc] sm:$0xf]
        %v955 = vunpack.c.l.b16 %v947
        %v956 = vunpack.c.l.b16 %v948
        %v957 = vunpack.c.l.b16 %v949
        %v958 = vunpack.c.l.b16 %v950
        %v959 = vpack.c.b16 %v956, %v955
        %v960 = vpack.c.b16 %v958, %v957
        %963 = vmatpush.bf16.msra.mxu0 0
        %964 = vmatpush.bf16.msra.mxu0 0
        %965 = vmatpush.bf16.msra.mxu0 0
        %966 = vmatpush.bf16.msra.mxu0 0
        %967 = vmatpush.bf16.msra.mxu0 0
        %968 = vmatpush.bf16.msra.mxu0 0
        %969 = vmatpush.bf16.msra.mxu0 %v960
        %970 = vmatpush.bf16.msra.mxu0 %v959
        %971 = vmatmul.bf16.gmra.mxu0 %v727
        %v972 = vpop.f32.mrf.mxu0
        %v973 = vadd.f32 0.0, %v972
        %v974 = vpop.f32.mrf.mxu0
        %v975 = vadd.f32 0.0, %v974
        %976 = vdwg.mxu0
        %s977 = scalar_lea.vmem %s658, 16
        %v978 = vld [vmem:[%s977] sm:$0xf]
        %v979 = vld [vmem:[%s977 + $0x4] sm:$0xf]
        %v980 = vld [vmem:[%s977 + $0x8] sm:$0xf]
        %v981 = vld [vmem:[%s977 + $0xc] sm:$0xf]
        %v986 = vunpack.c.l.b16 %v978
        %v987 = vunpack.c.l.b16 %v979
        %v988 = vunpack.c.l.b16 %v980
        %v989 = vunpack.c.l.b16 %v981
        %v990 = vpack.c.b16 %v987, %v986
        %v991 = vpack.c.b16 %v989, %v988
        %994 = vmatpush.bf16.msra.mxu0 0
        %995 = vmatpush.bf16.msra.mxu0 0
        %996 = vmatpush.bf16.msra.mxu0 0
        %997 = vmatpush.bf16.msra.mxu0 0
        %998 = vmatpush.bf16.msra.mxu0 0
        %999 = vmatpush.bf16.msra.mxu0 0
        %1000 = vmatpush.bf16.msra.mxu0 %v991
        %1001 = vmatpush.bf16.msra.mxu0 %v990
        %1002 = vmatmul.bf16.gmra.mxu0 %v727
        %v1003 = vpop.f32.mrf.mxu0
        %v1004 = vadd.f32 0.0, %v1003
        %v1005 = vpop.f32.mrf.mxu0
        %v1006 = vadd.f32 0.0, %v1005
        %1007 = vdwg.mxu0
        %v1008 = vpack.c.bf16 %v942, %v942
        %v1009 = vpack.c.bf16 %v944, %v944
        %v1010 = vpack.c.bf16 %v973, %v973
        %v1011 = vpack.c.bf16 %v975, %v975
        %v1012 = vpack.c.bf16 %v1004, %v1004
        %v1013 = vpack.c.bf16 %v1006, %v1006
        %v1015 = vsel %vm809, %v1008, 0
        %v1018 = vsel %vm809, %v1010, 0
        %1020 = vmatpush.bf16.xpose.msra.mxu0 0
        %1021 = vmatpush.bf16.xpose.msra.mxu0 0
        %1022 = vmatpush.bf16.xpose.msra.mxu0 0
        %1023 = vmatpush.bf16.xpose.msra.mxu0 0
        %1024 = vmatpush.bf16.xpose.msra.mxu0 0
        %1025 = vmatpush.bf16.xpose.msra.mxu0 0
        %1026 = vmatpush.bf16.xpose.msra.mxu0 0
        %1027 = vmatpush.bf16.xpose.msra.mxu0 %v1018
        %1028 = vmatmul.bf16.gmra.mxu0 %v1015
        %v1029 = vpop.f32.mrf.mxu0
        %v1030 = vadd.f32 0.0, %v1029
        %v1031 = vpop.f32.mrf.mxu0
        %1032 = vdwg.mxu0
        %v1034 = vsel %vm809, %v1009, 0
        %v1037 = vsel %vm809, %v1011, 0
        %1039 = vmatpush.bf16.xpose.msra.mxu0 0
        %1040 = vmatpush.bf16.xpose.msra.mxu0 0
        %1041 = vmatpush.bf16.xpose.msra.mxu0 0
        %1042 = vmatpush.bf16.xpose.msra.mxu0 0
        %1043 = vmatpush.bf16.xpose.msra.mxu0 0
        %1044 = vmatpush.bf16.xpose.msra.mxu0 0
        %1045 = vmatpush.bf16.xpose.msra.mxu0 0
        %1046 = vmatpush.bf16.xpose.msra.mxu0 %v1037
        %1047 = vmatmul.bf16.gmra.mxu0 %v1034
        %v1048 = vpop.f32.mrf.mxu0
        %v1049 = vadd.f32 0.0, %v1048
        %v1050 = vpop.f32.mrf.mxu0
        %1051 = vdwg.mxu0
        %v1052 = vsel %vm707, %v1030, -1000000.0
        %v1053 = vsel %vm708, %v1049, -1000000.0
        %v1054 = vsel %vm809, %v1052, -inf
        %1055 = vmax.xlane.f32.xlu0 %v1054
        %v1056 = vpop.xlane.xlu0 %1055
        %v1057 = vsel %vm809, %v1053, -inf
        %1058 = vmax.xlane.f32.xlu0 %v1057
        %v1059 = vpop.xlane.xlu0 %1058
        %v1060 = vsub.f32 %v1052, %v1056
        %v1061 = vsub.f32 %v1053, %v1059
        %v1062 = vmul.f32 %v1060, 1.442695
        %v1063 = vpow.pop %v1062
        %v1064 = vmul.f32 %v1061, 1.442695
        %v1065 = vpow.pop %v1064
        %v1066 = vsel %vm809, %v1063, 0.0
        %1067 = vadd.xlane.f32.xlu0 %v1066
        %v1068 = vpop.xlane.xlu0 %1067
        %v1069 = vsel %vm809, %v1065, 0.0
        %1070 = vadd.xlane.f32.xlu0 %v1069
        %v1071 = vpop.xlane.xlu0 %1070
        %v1072 = vrcp.pop %v1068
        %v1073 = vrcp.pop %v1071
        %v1074 = vmul.f32 %v1063, %v1072
        %v1075 = vmul.f32 %v1065, %v1073
        %v1076 = vpack.c.bf16 %v1074, %v1074
        %v1077 = vpack.c.bf16 %v1075, %v1075
        %v1079 = vsel %vm809, %v1076, 0
        %v1082 = vsel %vm877, %v1012, 0
        %1084 = vmatpush.bf16.msra.mxu0 0
        %1085 = vmatpush.bf16.msra.mxu0 0
        %1086 = vmatpush.bf16.msra.mxu0 0
        %1087 = vmatpush.bf16.msra.mxu0 0
        %1088 = vmatpush.bf16.msra.mxu0 0
        %1089 = vmatpush.bf16.msra.mxu0 0
        %1090 = vmatpush.bf16.msra.mxu0 0
        %1091 = vmatpush.bf16.msra.mxu0 %v1082
        %1092 = vmatmul.bf16.gmra.mxu0 %v1079
        %v1093 = vpop.f32.mrf.mxu0
        %v1094 = vadd.f32 0.0, %v1093
        %v1095 = vpop.f32.mrf.mxu0
        %1096 = vdwg.mxu0
        %v1098 = vsel %vm809, %v1077, 0
        %v1101 = vsel %vm877, %v1013, 0
        %1103 = vmatpush.bf16.msra.mxu0 0
        %1104 = vmatpush.bf16.msra.mxu0 0
        %1105 = vmatpush.bf16.msra.mxu0 0
        %1106 = vmatpush.bf16.msra.mxu0 0
        %1107 = vmatpush.bf16.msra.mxu0 0
        %1108 = vmatpush.bf16.msra.mxu0 0
        %1109 = vmatpush.bf16.msra.mxu0 0
        %1110 = vmatpush.bf16.msra.mxu0 %v1101
        %1111 = vmatmul.bf16.gmra.mxu0 %v1098
        %v1112 = vpop.f32.mrf.mxu0
        %v1113 = vadd.f32 0.0, %v1112
        %v1114 = vpop.f32.mrf.mxu0
        %1115 = vdwg.mxu0
        %v1116 = vpack.c.bf16 %v1113, %v1094
        %s1117 = scalar_lea.vmem %s663, 4
        %v1118 = vld [vmem:[%s1117] sm:$0xf]
        %v1120 = vsel %vm809, %v1116, 0
        %v1123 = vsel %vm877, %v1118, 0
        %1125 = vmatpush.bf16.msra.mxu0 0
        %1126 = vmatpush.bf16.msra.mxu0 0
        %1127 = vmatpush.bf16.msra.mxu0 0
        %1128 = vmatpush.bf16.msra.mxu0 0
        %1129 = vmatpush.bf16.msra.mxu0 0
        %1130 = vmatpush.bf16.msra.mxu0 0
        %1131 = vmatpush.bf16.msra.mxu0 0
        %1132 = vmatpush.bf16.msra.mxu0 %v1123
        %1133 = vmatmul.bf16.gmra.mxu0 %v1120
        %v1134 = vpop.f32.mrf.mxu0
        %v1135 = vadd.f32 0.0, %v1134
        %v1136 = vpop.f32.mrf.mxu0
        %v1137 = vadd.f32 0.0, %v1136
        %1138 = vdwg.mxu0
        %v1140 = vsel %vm809, %v913, 0
        %v1143 = vsel %vm877, %v914, 0
        %1145 = vmatpush.bf16.msra.mxu0 0
        %1146 = vmatpush.bf16.msra.mxu0 0
        %1147 = vmatpush.bf16.msra.mxu0 0
        %1148 = vmatpush.bf16.msra.mxu0 0
        %1149 = vmatpush.bf16.msra.mxu0 0
        %1150 = vmatpush.bf16.msra.mxu0 0
        %1151 = vmatpush.bf16.msra.mxu0 0
        %1152 = vmatpush.bf16.msra.mxu0 %v1143
        %1153 = vmatmul.bf16.gmra.mxu0 %v1140
        %v1154 = vpop.f32.mrf.mxu0
        %v1155 = vadd.f32 %v1135, %v1154
        %v1156 = vpop.f32.mrf.mxu0
        %v1157 = vadd.f32 %v1137, %v1156
        %1158 = vdwg.mxu0
        %s1159 = scalar_lea.vmem %s648, 32
        %v1160 = vld [vmem:[%s1159] sm:$0xf]
        %v1161 = vld [vmem:[%s1159 + $0x4] sm:$0xf]
        %v1162 = vld [vmem:[%s1159 + $0x8] sm:$0xf]
        %v1163 = vld [vmem:[%s1159 + $0xc] sm:$0xf]
        %v1168 = vunpack.c.l.b16 %v1160
        %v1169 = vunpack.c.l.b16 %v1161
        %v1170 = vunpack.c.l.b16 %v1162
        %v1171 = vunpack.c.l.b16 %v1163
        %v1172 = vpack.c.b16 %v1169, %v1168
        %v1173 = vpack.c.b16 %v1171, %v1170
        %1176 = vmatpush.bf16.msra.mxu0 0
        %1177 = vmatpush.bf16.msra.mxu0 0
        %1178 = vmatpush.bf16.msra.mxu0 0
        %1179 = vmatpush.bf16.msra.mxu0 0
        %1180 = vmatpush.bf16.msra.mxu0 0
        %1181 = vmatpush.bf16.msra.mxu0 0
        %1182 = vmatpush.bf16.msra.mxu0 %v1173
        %1183 = vmatpush.bf16.msra.mxu0 %v1172
        %1184 = vmatmul.bf16.gmra.mxu0 %v727
        %v1185 = vpop.f32.mrf.mxu0
        %v1186 = vadd.f32 0.0, %v1185
        %v1187 = vpop.f32.mrf.mxu0
        %v1188 = vadd.f32 0.0, %v1187
        %1189 = vdwg.mxu0
        %s1190 = scalar_lea.vmem %s653, 32
        %v1191 = vld [vmem:[%s1190] sm:$0xf]
        %v1192 = vld [vmem:[%s1190 + $0x4] sm:$0xf]
        %v1193 = vld [vmem:[%s1190 + $0x8] sm:$0xf]
        %v1194 = vld [vmem:[%s1190 + $0xc] sm:$0xf]
        %v1199 = vunpack.c.l.b16 %v1191
        %v1200 = vunpack.c.l.b16 %v1192
        %v1201 = vunpack.c.l.b16 %v1193
        %v1202 = vunpack.c.l.b16 %v1194
        %v1203 = vpack.c.b16 %v1200, %v1199
        %v1204 = vpack.c.b16 %v1202, %v1201
        %1207 = vmatpush.bf16.msra.mxu0 0
        %1208 = vmatpush.bf16.msra.mxu0 0
        %1209 = vmatpush.bf16.msra.mxu0 0
        %1210 = vmatpush.bf16.msra.mxu0 0
        %1211 = vmatpush.bf16.msra.mxu0 0
        %1212 = vmatpush.bf16.msra.mxu0 0
        %1213 = vmatpush.bf16.msra.mxu0 %v1204
        %1214 = vmatpush.bf16.msra.mxu0 %v1203
        %1215 = vmatmul.bf16.gmra.mxu0 %v727
        %v1216 = vpop.f32.mrf.mxu0
        %v1217 = vadd.f32 0.0, %v1216
        %v1218 = vpop.f32.mrf.mxu0
        %v1219 = vadd.f32 0.0, %v1218
        %1220 = vdwg.mxu0
        %s1221 = scalar_lea.vmem %s658, 32
        %v1222 = vld [vmem:[%s1221] sm:$0xf]
        %v1223 = vld [vmem:[%s1221 + $0x4] sm:$0xf]
        %v1224 = vld [vmem:[%s1221 + $0x8] sm:$0xf]
        %v1225 = vld [vmem:[%s1221 + $0xc] sm:$0xf]
        %v1230 = vunpack.c.l.b16 %v1222
        %v1231 = vunpack.c.l.b16 %v1223
        %v1232 = vunpack.c.l.b16 %v1224
        %v1233 = vunpack.c.l.b16 %v1225
        %v1234 = vpack.c.b16 %v1231, %v1230
        %v1235 = vpack.c.b16 %v1233, %v1232
        %1238 = vmatpush.bf16.msra.mxu0 0
        %1239 = vmatpush.bf16.msra.mxu0 0
        %1240 = vmatpush.bf16.msra.mxu0 0
        %1241 = vmatpush.bf16.msra.mxu0 0
        %1242 = vmatpush.bf16.msra.mxu0 0
        %1243 = vmatpush.bf16.msra.mxu0 0
        %1244 = vmatpush.bf16.msra.mxu0 %v1235
        %1245 = vmatpush.bf16.msra.mxu0 %v1234
        %1246 = vmatmul.bf16.gmra.mxu0 %v727
        %v1247 = vpop.f32.mrf.mxu0
        %v1248 = vadd.f32 0.0, %v1247
        %v1249 = vpop.f32.mrf.mxu0
        %v1250 = vadd.f32 0.0, %v1249
        %1251 = vdwg.mxu0
        %v1252 = vpack.c.bf16 %v1186, %v1186
        %v1253 = vpack.c.bf16 %v1188, %v1188
        %v1254 = vpack.c.bf16 %v1217, %v1217
        %v1255 = vpack.c.bf16 %v1219, %v1219
        %v1256 = vpack.c.bf16 %v1248, %v1248
        %v1257 = vpack.c.bf16 %v1250, %v1250
        %v1259 = vsel %vm809, %v1252, 0
        %v1262 = vsel %vm809, %v1254, 0
        %1264 = vmatpush.bf16.xpose.msra.mxu0 0
        %1265 = vmatpush.bf16.xpose.msra.mxu0 0
        %1266 = vmatpush.bf16.xpose.msra.mxu0 0
        %1267 = vmatpush.bf16.xpose.msra.mxu0 0
        %1268 = vmatpush.bf16.xpose.msra.mxu0 0
        %1269 = vmatpush.bf16.xpose.msra.mxu0 0
        %1270 = vmatpush.bf16.xpose.msra.mxu0 0
        %1271 = vmatpush.bf16.xpose.msra.mxu0 %v1262
        %1272 = vmatmul.bf16.gmra.mxu0 %v1259
        %v1273 = vpop.f32.mrf.mxu0
        %v1274 = vadd.f32 0.0, %v1273
        %v1275 = vpop.f32.mrf.mxu0
        %1276 = vdwg.mxu0
        %v1278 = vsel %vm809, %v1253, 0
        %v1281 = vsel %vm809, %v1255, 0
        %1283 = vmatpush.bf16.xpose.msra.mxu0 0
        %1284 = vmatpush.bf16.xpose.msra.mxu0 0
        %1285 = vmatpush.bf16.xpose.msra.mxu0 0
        %1286 = vmatpush.bf16.xpose.msra.mxu0 0
        %1287 = vmatpush.bf16.xpose.msra.mxu0 0
        %1288 = vmatpush.bf16.xpose.msra.mxu0 0
        %1289 = vmatpush.bf16.xpose.msra.mxu0 0
        %1290 = vmatpush.bf16.xpose.msra.mxu0 %v1281
        %1291 = vmatmul.bf16.gmra.mxu0 %v1278
        %v1292 = vpop.f32.mrf.mxu0
        %v1293 = vadd.f32 0.0, %v1292
        %v1294 = vpop.f32.mrf.mxu0
        %1295 = vdwg.mxu0
        %v1296 = vsel %vm707, %v1274, -1000000.0
        %v1297 = vsel %vm708, %v1293, -1000000.0
        %v1298 = vsel %vm809, %v1296, -inf
        %1299 = vmax.xlane.f32.xlu0 %v1298
        %v1300 = vpop.xlane.xlu0 %1299
        %v1301 = vsel %vm809, %v1297, -inf
        %1302 = vmax.xlane.f32.xlu0 %v1301
        %v1303 = vpop.xlane.xlu0 %1302
        %v1304 = vsub.f32 %v1296, %v1300
        %v1305 = vsub.f32 %v1297, %v1303
        %v1306 = vmul.f32 %v1304, 1.442695
        %v1307 = vpow.pop %v1306
        %v1308 = vmul.f32 %v1305, 1.442695
        %v1309 = vpow.pop %v1308
        %v1310 = vsel %vm809, %v1307, 0.0
        %1311 = vadd.xlane.f32.xlu0 %v1310
        %v1312 = vpop.xlane.xlu0 %1311
        %v1313 = vsel %vm809, %v1309, 0.0
        %1314 = vadd.xlane.f32.xlu0 %v1313
        %v1315 = vpop.xlane.xlu0 %1314
        %v1316 = vrcp.pop %v1312
        %v1317 = vrcp.pop %v1315
        %v1318 = vmul.f32 %v1307, %v1316
        %v1319 = vmul.f32 %v1309, %v1317
        %v1320 = vpack.c.bf16 %v1318, %v1318
        %v1321 = vpack.c.bf16 %v1319, %v1319
        %v1323 = vsel %vm809, %v1320, 0
        %v1326 = vsel %vm877, %v1256, 0
        %1328 = vmatpush.bf16.msra.mxu0 0
        %1329 = vmatpush.bf16.msra.mxu0 0
        %1330 = vmatpush.bf16.msra.mxu0 0
        %1331 = vmatpush.bf16.msra.mxu0 0
        %1332 = vmatpush.bf16.msra.mxu0 0
        %1333 = vmatpush.bf16.msra.mxu0 0
        %1334 = vmatpush.bf16.msra.mxu0 0
        %1335 = vmatpush.bf16.msra.mxu0 %v1326
        %1336 = vmatmul.bf16.gmra.mxu0 %v1323
        %v1337 = vpop.f32.mrf.mxu0
        %v1338 = vadd.f32 0.0, %v1337
        %v1339 = vpop.f32.mrf.mxu0
        %1340 = vdwg.mxu0
        %v1342 = vsel %vm809, %v1321, 0
        %v1345 = vsel %vm877, %v1257, 0
        %1347 = vmatpush.bf16.msra.mxu0 0
        %1348 = vmatpush.bf16.msra.mxu0 0
        %1349 = vmatpush.bf16.msra.mxu0 0
        %1350 = vmatpush.bf16.msra.mxu0 0
        %1351 = vmatpush.bf16.msra.mxu0 0
        %1352 = vmatpush.bf16.msra.mxu0 0
        %1353 = vmatpush.bf16.msra.mxu0 0
        %1354 = vmatpush.bf16.msra.mxu0 %v1345
        %1355 = vmatmul.bf16.gmra.mxu0 %v1342
        %v1356 = vpop.f32.mrf.mxu0
        %v1357 = vadd.f32 0.0, %v1356
        %v1358 = vpop.f32.mrf.mxu0
        %1359 = vdwg.mxu0
        %v1360 = vpack.c.bf16 %v1357, %v1338
        %s1361 = scalar_lea.vmem %s663, 8
        %v1362 = vld [vmem:[%s1361] sm:$0xf]
        %v1364 = vsel %vm809, %v1360, 0
        %v1367 = vsel %vm877, %v1362, 0
        %1369 = vmatpush.bf16.msra.mxu0 0
        %1370 = vmatpush.bf16.msra.mxu0 0
        %1371 = vmatpush.bf16.msra.mxu0 0
        %1372 = vmatpush.bf16.msra.mxu0 0
        %1373 = vmatpush.bf16.msra.mxu0 0
        %1374 = vmatpush.bf16.msra.mxu0 0
        %1375 = vmatpush.bf16.msra.mxu0 0
        %1376 = vmatpush.bf16.msra.mxu0 %v1367
        %1377 = vmatmul.bf16.gmra.mxu0 %v1364
        %v1378 = vpop.f32.mrf.mxu0
        %v1379 = vadd.f32 0.0, %v1378
        %v1380 = vpop.f32.mrf.mxu0
        %v1381 = vadd.f32 0.0, %v1380
        %1382 = vdwg.mxu0
        %v1383 = vadd.f32 %v1155, %v1379
        %v1384 = vadd.f32 %v1157, %v1381
        %s1385 = scalar_lea.vmem %s648, 48
        %v1386 = vld [vmem:[%s1385] sm:$0xf]
        %v1387 = vld [vmem:[%s1385 + $0x4] sm:$0xf]
        %v1388 = vld [vmem:[%s1385 + $0x8] sm:$0xf]
        %v1389 = vld [vmem:[%s1385 + $0xc] sm:$0xf]
        %v1394 = vunpack.c.l.b16 %v1386
        %v1395 = vunpack.c.l.b16 %v1387
        %v1396 = vunpack.c.l.b16 %v1388
        %v1397 = vunpack.c.l.b16 %v1389
        %v1398 = vpack.c.b16 %v1395, %v1394
        %v1399 = vpack.c.b16 %v1397, %v1396
        %1402 = vmatpush.bf16.msra.mxu0 0
        %1403 = vmatpush.bf16.msra.mxu0 0
        %1404 = vmatpush.bf16.msra.mxu0 0
        %1405 = vmatpush.bf16.msra.mxu0 0
        %1406 = vmatpush.bf16.msra.mxu0 0
        %1407 = vmatpush.bf16.msra.mxu0 0
        %1408 = vmatpush.bf16.msra.mxu0 %v1399
        %1409 = vmatpush.bf16.msra.mxu0 %v1398
        %1410 = vmatmul.bf16.gmra.mxu0 %v727
        %v1411 = vpop.f32.mrf.mxu0
        %v1412 = vadd.f32 0.0, %v1411
        %v1413 = vpop.f32.mrf.mxu0
        %v1414 = vadd.f32 0.0, %v1413
        %1415 = vdwg.mxu0
        %s1416 = scalar_lea.vmem %s653, 48
        %v1417 = vld [vmem:[%s1416] sm:$0xf]
        %v1418 = vld [vmem:[%s1416 + $0x4] sm:$0xf]
        %v1419 = vld [vmem:[%s1416 + $0x8] sm:$0xf]
        %v1420 = vld [vmem:[%s1416 + $0xc] sm:$0xf]
        %v1425 = vunpack.c.l.b16 %v1417
        %v1426 = vunpack.c.l.b16 %v1418
        %v1427 = vunpack.c.l.b16 %v1419
        %v1428 = vunpack.c.l.b16 %v1420
        %v1429 = vpack.c.b16 %v1426, %v1425
        %v1430 = vpack.c.b16 %v1428, %v1427
        %1433 = vmatpush.bf16.msra.mxu0 0
        %1434 = vmatpush.bf16.msra.mxu0 0
        %1435 = vmatpush.bf16.msra.mxu0 0
        %1436 = vmatpush.bf16.msra.mxu0 0
        %1437 = vmatpush.bf16.msra.mxu0 0
        %1438 = vmatpush.bf16.msra.mxu0 0
        %1439 = vmatpush.bf16.msra.mxu0 %v1430
        %1440 = vmatpush.bf16.msra.mxu0 %v1429
        %1441 = vmatmul.bf16.gmra.mxu0 %v727
        %v1442 = vpop.f32.mrf.mxu0
        %v1443 = vadd.f32 0.0, %v1442
        %v1444 = vpop.f32.mrf.mxu0
        %v1445 = vadd.f32 0.0, %v1444
        %1446 = vdwg.mxu0
        %s1447 = scalar_lea.vmem %s658, 48
        %v1448 = vld [vmem:[%s1447] sm:$0xf]
        %v1449 = vld [vmem:[%s1447 + $0x4] sm:$0xf]
        %v1450 = vld [vmem:[%s1447 + $0x8] sm:$0xf]
        %v1451 = vld [vmem:[%s1447 + $0xc] sm:$0xf]
        %v1456 = vunpack.c.l.b16 %v1448
        %v1457 = vunpack.c.l.b16 %v1449
        %v1458 = vunpack.c.l.b16 %v1450
        %v1459 = vunpack.c.l.b16 %v1451
        %v1460 = vpack.c.b16 %v1457, %v1456
        %v1461 = vpack.c.b16 %v1459, %v1458
        %1464 = vmatpush.bf16.msra.mxu0 0
        %1465 = vmatpush.bf16.msra.mxu0 0
        %1466 = vmatpush.bf16.msra.mxu0 0
        %1467 = vmatpush.bf16.msra.mxu0 0
        %1468 = vmatpush.bf16.msra.mxu0 0
        %1469 = vmatpush.bf16.msra.mxu0 0
        %1470 = vmatpush.bf16.msra.mxu0 %v1461
        %1471 = vmatpush.bf16.msra.mxu0 %v1460
        %1472 = vmatmul.bf16.gmra.mxu0 %v727
        %v1473 = vpop.f32.mrf.mxu0
        %v1474 = vadd.f32 0.0, %v1473
        %v1475 = vpop.f32.mrf.mxu0
        %v1476 = vadd.f32 0.0, %v1475
        %1477 = vdwg.mxu0
        %v1478 = vpack.c.bf16 %v1412, %v1412
        %v1479 = vpack.c.bf16 %v1414, %v1414
        %v1480 = vpack.c.bf16 %v1443, %v1443
        %v1481 = vpack.c.bf16 %v1445, %v1445
        %v1482 = vpack.c.bf16 %v1474, %v1474
        %v1483 = vpack.c.bf16 %v1476, %v1476
        %v1485 = vsel %vm809, %v1478, 0
        %v1488 = vsel %vm809, %v1480, 0
        %1490 = vmatpush.bf16.xpose.msra.mxu0 0
        %1491 = vmatpush.bf16.xpose.msra.mxu0 0
        %1492 = vmatpush.bf16.xpose.msra.mxu0 0
        %1493 = vmatpush.bf16.xpose.msra.mxu0 0
        %1494 = vmatpush.bf16.xpose.msra.mxu0 0
        %1495 = vmatpush.bf16.xpose.msra.mxu0 0
        %1496 = vmatpush.bf16.xpose.msra.mxu0 0
        %1497 = vmatpush.bf16.xpose.msra.mxu0 %v1488
        %1498 = vmatmul.bf16.gmra.mxu0 %v1485
        %v1499 = vpop.f32.mrf.mxu0
        %v1500 = vadd.f32 0.0, %v1499
        %v1501 = vpop.f32.mrf.mxu0
        %1502 = vdwg.mxu0
        %v1504 = vsel %vm809, %v1479, 0
        %v1507 = vsel %vm809, %v1481, 0
        %1509 = vmatpush.bf16.xpose.msra.mxu0 0
        %1510 = vmatpush.bf16.xpose.msra.mxu0 0
        %1511 = vmatpush.bf16.xpose.msra.mxu0 0
        %1512 = vmatpush.bf16.xpose.msra.mxu0 0
        %1513 = vmatpush.bf16.xpose.msra.mxu0 0
        %1514 = vmatpush.bf16.xpose.msra.mxu0 0
        %1515 = vmatpush.bf16.xpose.msra.mxu0 0
        %1516 = vmatpush.bf16.xpose.msra.mxu0 %v1507
        %1517 = vmatmul.bf16.gmra.mxu0 %v1504
        %v1518 = vpop.f32.mrf.mxu0
        %v1519 = vadd.f32 0.0, %v1518
        %v1520 = vpop.f32.mrf.mxu0
        %1521 = vdwg.mxu0
        %v1522 = vsel %vm707, %v1500, -1000000.0
        %v1523 = vsel %vm708, %v1519, -1000000.0
        %v1524 = vsel %vm809, %v1522, -inf
        %1525 = vmax.xlane.f32.xlu0 %v1524
        %v1526 = vpop.xlane.xlu0 %1525
        %v1527 = vsel %vm809, %v1523, -inf
        %1528 = vmax.xlane.f32.xlu0 %v1527
        %v1529 = vpop.xlane.xlu0 %1528
        %v1530 = vsub.f32 %v1522, %v1526
        %v1531 = vsub.f32 %v1523, %v1529
        %v1532 = vmul.f32 %v1530, 1.442695
        %v1533 = vpow.pop %v1532
        %v1534 = vmul.f32 %v1531, 1.442695
        %v1535 = vpow.pop %v1534
        %v1536 = vsel %vm809, %v1533, 0.0
        %1537 = vadd.xlane.f32.xlu0 %v1536
        %v1538 = vpop.xlane.xlu0 %1537
        %v1539 = vsel %vm809, %v1535, 0.0
        %1540 = vadd.xlane.f32.xlu0 %v1539
        %v1541 = vpop.xlane.xlu0 %1540
        %v1542 = vrcp.pop %v1538
        %v1543 = vrcp.pop %v1541
        %v1544 = vmul.f32 %v1533, %v1542
        %v1545 = vmul.f32 %v1535, %v1543
        %v1546 = vpack.c.bf16 %v1544, %v1544
        %v1547 = vpack.c.bf16 %v1545, %v1545
        %v1549 = vsel %vm809, %v1546, 0
        %v1552 = vsel %vm877, %v1482, 0
        %1554 = vmatpush.bf16.msra.mxu0 0
        %1555 = vmatpush.bf16.msra.mxu0 0
        %1556 = vmatpush.bf16.msra.mxu0 0
        %1557 = vmatpush.bf16.msra.mxu0 0
        %1558 = vmatpush.bf16.msra.mxu0 0
        %1559 = vmatpush.bf16.msra.mxu0 0
        %1560 = vmatpush.bf16.msra.mxu0 0
        %1561 = vmatpush.bf16.msra.mxu0 %v1552
        %1562 = vmatmul.bf16.gmra.mxu0 %v1549
        %v1563 = vpop.f32.mrf.mxu0
        %v1564 = vadd.f32 0.0, %v1563
        %v1565 = vpop.f32.mrf.mxu0
        %1566 = vdwg.mxu0
        %v1568 = vsel %vm809, %v1547, 0
        %v1571 = vsel %vm877, %v1483, 0
        %1573 = vmatpush.bf16.msra.mxu0 0
        %1574 = vmatpush.bf16.msra.mxu0 0
        %1575 = vmatpush.bf16.msra.mxu0 0
        %1576 = vmatpush.bf16.msra.mxu0 0
        %1577 = vmatpush.bf16.msra.mxu0 0
        %1578 = vmatpush.bf16.msra.mxu0 0
        %1579 = vmatpush.bf16.msra.mxu0 0
        %1580 = vmatpush.bf16.msra.mxu0 %v1571
        %1581 = vmatmul.bf16.gmra.mxu0 %v1568
        %v1582 = vpop.f32.mrf.mxu0
        %v1583 = vadd.f32 0.0, %v1582
        %v1584 = vpop.f32.mrf.mxu0
        %1585 = vdwg.mxu0
        %v1586 = vpack.c.bf16 %v1583, %v1564
        %s1587 = scalar_lea.vmem %s663, 12
        %v1588 = vld [vmem:[%s1587] sm:$0xf]
        %v1590 = vsel %vm809, %v1586, 0
        %v1593 = vsel %vm877, %v1588, 0
        %1595 = vmatpush.bf16.msra.mxu0 0
        %1596 = vmatpush.bf16.msra.mxu0 0
        %1597 = vmatpush.bf16.msra.mxu0 0
        %1598 = vmatpush.bf16.msra.mxu0 0
        %1599 = vmatpush.bf16.msra.mxu0 0
        %1600 = vmatpush.bf16.msra.mxu0 0
        %1601 = vmatpush.bf16.msra.mxu0 0
        %1602 = vmatpush.bf16.msra.mxu0 %v1593
        %1603 = vmatmul.bf16.gmra.mxu0 %v1590
        %v1604 = vpop.f32.mrf.mxu0
        %v1605 = vadd.f32 0.0, %v1604
        %v1606 = vpop.f32.mrf.mxu0
        %v1607 = vadd.f32 0.0, %v1606
        %1608 = vdwg.mxu0
        %v1609 = vadd.f32 %v1383, %v1605
        %v1610 = vadd.f32 %v1384, %v1607
        %v1611 = vadd.f32 %v702, %v1609
        %v1612 = vadd.f32 %v703, %v1610
        %v1613 = vld [vmem:[%s666] sm:$0x1]
        %v1614 = vld [vmem:[%s669] sm:$0x1]
        %v1615 = vsel %vm725, %v1611, 0.0
        %1616 = vadd.xlane.f32.xlu0 %v1615
        %v1617 = vpop.xlane.xlu0 %1616
        %v1618 = vsel %vm725, %v1612, 0.0
        %1619 = vadd.xlane.f32.xlu0 %v1618
        %v1620 = vpop.xlane.xlu0 %1619
        %v1621 = vrcp.pop 32.0
        %v1622 = vmul.f32 32.0, %v1621
        %v1623 = vsub.f32 1.0, %v1622
        %v1624 = vmul.f32 %v1621, %v1623
        %v1625 = vadd.f32 %v1621, %v1624
        %vm1626 = vweird.f32 %v1621
        %v1627 = vsel %vm1626, %v1621, %v1625
        %v1628 = vmul.f32 %v1617, %v1627
        %v1629 = vmul.f32 %v1620, %v1627
        %v1630 = vsub.f32 %v1611, %v1628
        %v1631 = vsub.f32 %v1612, %v1629
        %v1632 = vmul.f32 %v1630, %v1630
        %v1633 = vmul.f32 %v1631, %v1631
        %v1634 = vsel %vm725, %v1632, 0.0
        %1635 = vadd.xlane.f32.xlu0 %v1634
        %v1636 = vpop.xlane.xlu0 %1635
        %v1637 = vsel %vm725, %v1633, 0.0
        %1638 = vadd.xlane.f32.xlu0 %v1637
        %v1639 = vpop.xlane.xlu0 %1638
        %v1640 = vmul.f32 %v1636, %v1627
        %v1641 = vmul.f32 %v1639, %v1627
        %v1642 = vadd.f32 %v1640, 1e-05
        %v1643 = vadd.f32 %v1641, 1e-05
        %v1644 = vrsqrt.pop %v1642
        %v1645 = vmul.f32 %v1644, %v1642
        %v1646 = vmul.f32 %v1645, %v1644
        %v1647 = vmul.f32 0.5, %v1646
        %v1648 = vsub.f32 1.5, %v1647
        %v1649 = vmul.f32 %v1644, %v1648
        %vm1650 = vweird.f32 %v1642
        %vm1651 = vweird.f32 %v1644
        %vm1652 = vmor %vm1650, %vm1651
        %v1653 = vsel %vm1652, %v1644, %v1649
        %v1654 = vrsqrt.pop %v1643
        %v1655 = vmul.f32 %v1654, %v1643
        %v1656 = vmul.f32 %v1655, %v1654
        %v1657 = vmul.f32 0.5, %v1656
        %v1658 = vsub.f32 1.5, %v1657
        %v1659 = vmul.f32 %v1654, %v1658
        %vm1660 = vweird.f32 %v1643
        %vm1661 = vweird.f32 %v1654
        %vm1662 = vmor %vm1660, %vm1661
        %v1663 = vsel %vm1662, %v1654, %v1659
        %v1664 = vmul.f32 %v1630, %v1653
        %v1665 = vmul.f32 %v1631, %v1663
        %v1667 = vperm.slane %v1613, 0
        %v1669 = vmul.f32 %v1664, %v1667
        %v1670 = vmul.f32 %v1665, %v1667
        %v1672 = vperm.slane %v1614, 0
        %v1674 = vadd.f32 %v1669, %v1672
        %v1675 = vadd.f32 %v1670, %v1672
        %v1676 = vpack.c.bf16 %v1675, %v1674
        %v1677 = vld [vmem:[%s674] sm:$0xf]
        %v1678 = vld [vmem:[%s674 + $0x4] sm:$0xf]
        %v1679 = vld [vmem:[%s674 + $0x8] sm:$0xf]
        %v1680 = vld [vmem:[%s674 + $0xc] sm:$0xf]
        %v1681 = vld [vmem:[%s677] sm:$0x1]
        %v1683 = vperm.slane %v1681, 0
        %v1689 = vunpack.c.l.b16 %v1677
        %v1690 = vunpack.c.l.b16 %v1678
        %v1691 = vunpack.c.l.b16 %v1679
        %v1692 = vunpack.c.l.b16 %v1680
        %v1693 = vpack.c.b16 %v1690, %v1689
        %v1694 = vpack.c.b16 %v1692, %v1691
        %v1698 = vsel %vm725, %v1676, 0
        %1700 = vmatpush.bf16.msra.mxu0 0
        %1701 = vmatpush.bf16.msra.mxu0 0
        %1702 = vmatpush.bf16.msra.mxu0 0
        %1703 = vmatpush.bf16.msra.mxu0 0
        %1704 = vmatpush.bf16.msra.mxu0 0
        %1705 = vmatpush.bf16.msra.mxu0 0
        %1706 = vmatpush.bf16.msra.mxu0 %v1694
        %1707 = vmatpush.bf16.msra.mxu0 %v1693
        %1708 = vmatmul.bf16.gmra.mxu0 %v1698
        %v1709 = vpop.f32.mrf.mxu0
        %v1710 = vadd.f32 %v1683, %v1709
        %v1711 = vpop.f32.mrf.mxu0
        %v1712 = vadd.f32 %v1683, %v1711
        %1713 = vdwg.mxu0
        %v1714 = vmax.f32 %v1710, 0.0
        %v1715 = vmax.f32 %v1712, 0.0
        %v1716 = vpack.c.bf16 %v1715, %v1714
        %v1717 = vld [vmem:[%s682] sm:$0xf]
        %v1718 = vld [vmem:[%s682 + $0x4] sm:$0xf]
        %v1719 = vld [vmem:[%s682 + $0x8] sm:$0xf]
        %v1720 = vld [vmem:[%s682 + $0xc] sm:$0xf]
        %v1721 = vld [vmem:[%s682 + $0x10] sm:$0xf]
        %v1722 = vld [vmem:[%s682 + $0x14] sm:$0xf]
        %v1723 = vld [vmem:[%s682 + $0x18] sm:$0xf]
        %v1724 = vld [vmem:[%s682 + $0x1c] sm:$0xf]
        %v1725 = vld [vmem:[%s685] sm:$0x1]
        %v1727 = vperm.slane %v1725, 0
        %v1737 = vunpack.c.l.b16 %v1717
        %v1738 = vunpack.c.l.b16 %v1718
        %v1739 = vunpack.c.l.b16 %v1719
        %v1740 = vunpack.c.l.b16 %v1720
        %v1741 = vunpack.c.l.b16 %v1721
        %v1742 = vunpack.c.l.b16 %v1722
        %v1743 = vunpack.c.l.b16 %v1723
        %v1744 = vunpack.c.l.b16 %v1724
        %v1745 = vpack.c.b16 %v1738, %v1737
        %v1746 = vpack.c.b16 %v1740, %v1739
        %v1747 = vpack.c.b16 %v1742, %v1741
        %v1748 = vpack.c.b16 %v1744, %v1743
        %vm1753 = vcmask 523264
        %v1755 = vsel %vm1753, %v1716, 0
        %1757 = vmatpush.bf16.msra.mxu0 0
        %1758 = vmatpush.bf16.msra.mxu0 0
        %1759 = vmatpush.bf16.msra.mxu0 0
        %1760 = vmatpush.bf16.msra.mxu0 0
        %1761 = vmatpush.bf16.msra.mxu0 %v1748
        %1762 = vmatpush.bf16.msra.mxu0 %v1747
        %1763 = vmatpush.bf16.msra.mxu0 %v1746
        %1764 = vmatpush.bf16.msra.mxu0 %v1745
        %1765 = vmatmul.bf16.gmra.mxu0 %v1755
        %v1766 = vpop.f32.mrf.mxu0
        %v1767 = vadd.f32 %v1727, %v1766
        %v1768 = vpop.f32.mrf.mxu0
        %v1769 = vadd.f32 %v1727, %v1768
        %1770 = vdwg.mxu0
        %v1771 = vadd.f32 %v1674, %v1767
        %v1772 = vadd.f32 %v1675, %v1769
        %v1773 = vld [vmem:[%s688] sm:$0x1]
        %v1774 = vld [vmem:[%s691] sm:$0x1]
        %v1775 = vsel %vm725, %v1771, 0.0
        %1776 = vadd.xlane.f32.xlu0 %v1775
        %v1777 = vpop.xlane.xlu0 %1776
        %v1778 = vsel %vm725, %v1772, 0.0
        %1779 = vadd.xlane.f32.xlu0 %v1778
        %v1780 = vpop.xlane.xlu0 %1779
        %v1781 = vmul.f32 %v1777, %v1627
        %v1782 = vmul.f32 %v1780, %v1627
        %v1783 = vsub.f32 %v1771, %v1781
        %v1784 = vsub.f32 %v1772, %v1782
        %v1785 = vmul.f32 %v1783, %v1783
        %v1786 = vmul.f32 %v1784, %v1784
        %v1787 = vsel %vm725, %v1785, 0.0
        %1788 = vadd.xlane.f32.xlu0 %v1787
        %v1789 = vpop.xlane.xlu0 %1788
        %v1790 = vsel %vm725, %v1786, 0.0
        %1791 = vadd.xlane.f32.xlu0 %v1790
        %v1792 = vpop.xlane.xlu0 %1791
        %v1793 = vmul.f32 %v1789, %v1627
        %v1794 = vmul.f32 %v1792, %v1627
        %v1795 = vadd.f32 %v1793, 1e-05
        %v1796 = vadd.f32 %v1794, 1e-05
        %v1797 = vrsqrt.pop %v1795
        %v1798 = vmul.f32 %v1797, %v1795
        %v1799 = vmul.f32 %v1798, %v1797
        %v1800 = vmul.f32 0.5, %v1799
        %v1801 = vsub.f32 1.5, %v1800
        %v1802 = vmul.f32 %v1797, %v1801
        %vm1803 = vweird.f32 %v1795
        %vm1804 = vweird.f32 %v1797
        %vm1805 = vmor %vm1803, %vm1804
        %v1806 = vsel %vm1805, %v1797, %v1802
        %v1807 = vrsqrt.pop %v1796
        %v1808 = vmul.f32 %v1807, %v1796
        %v1809 = vmul.f32 %v1808, %v1807
        %v1810 = vmul.f32 0.5, %v1809
        %v1811 = vsub.f32 1.5, %v1810
        %v1812 = vmul.f32 %v1807, %v1811
        %vm1813 = vweird.f32 %v1796
        %vm1814 = vweird.f32 %v1807
        %vm1815 = vmor %vm1813, %vm1814
        %v1816 = vsel %vm1815, %v1807, %v1812
        %v1817 = vmul.f32 %v1783, %v1806
        %v1818 = vmul.f32 %v1784, %v1816
        %v1820 = vperm.slane %v1773, 0
        %v1822 = vmul.f32 %v1817, %v1820
        %v1823 = vmul.f32 %v1818, %v1820
        %v1825 = vperm.slane %v1774, 0
        %v1827 = vadd.f32 %v1822, %v1825
        %v1828 = vadd.f32 %v1823, %v1825
        %1829 = vst.msk [vmem:[#allocation2] sm:$0xff] %vm725, %v1827
        %1830 = vst.msk [vmem:[#allocation2 + $0x8] sm:$0xff] %vm725, %v1828
        %p1831 = scmp.eq.s32.totalorder %s28, 1
        // Predicated region
        $region89: #{tpu_custom_call.1} parent=83 // pred_check
          %p1832 = pneg %p1831
        $region90: #{tpu_custom_call.1} parent=83 // pred_check_branch
          %1834 = sbr.rel (%p1832) target = $region92
        $region91: #{tpu_custom_call.1} parent=83 // pred_region
          %v1835 = vpack.c.bf16 %v1828, %v1827
          %v1836 = vld [vmem:[%s14] sm:$0xf]
          %v1837 = vld [vmem:[%s14 + $0x4] sm:$0xf]
          %v1838 = vld [vmem:[%s14 + $0x8] sm:$0xf]
          %v1839 = vld [vmem:[%s14 + $0xc] sm:$0xf]
          %v1840 = vld [vmem:[%s15] sm:$0x1]
          %v1842 = vperm.slane %v1840, 0
          %v1848 = vunpack.c.l.b16 %v1836
          %v1849 = vunpack.c.l.b16 %v1837
          %v1850 = vunpack.c.l.b16 %v1838
          %v1851 = vunpack.c.l.b16 %v1839
          %v1852 = vpack.c.b16 %v1849, %v1848
          %v1853 = vpack.c.b16 %v1851, %v1850
          %v1857 = vsel %vm725, %v1835, 0
          %1859 = vmatpush.bf16.msra.mxu0 0
          %1860 = vmatpush.bf16.msra.mxu0 0
          %1861 = vmatpush.bf16.msra.mxu0 0
          %1862 = vmatpush.bf16.msra.mxu0 0
          %1863 = vmatpush.bf16.msra.mxu0 0
          %1864 = vmatpush.bf16.msra.mxu0 0
          %1865 = vmatpush.bf16.msra.mxu0 %v1853
          %1866 = vmatpush.bf16.msra.mxu0 %v1852
          %1867 = vmatmul.bf16.gmra.mxu0 %v1857
          %v1868 = vpop.f32.mrf.mxu0
          %v1869 = vadd.f32 %v1842, %v1868
          %v1870 = vpop.f32.mrf.mxu0
          %v1871 = vadd.f32 %v1842, %v1870
          %1872 = vdwg.mxu0
          %1873 = vst.msk [vmem:[#allocation3] sm:$0xff] %vm725, %v1869
          %1874 = vst.msk [vmem:[#allocation3 + $0x8] sm:$0xff] %vm725, %v1871
        $region92: #{tpu_custom_call.1} parent=83 // pred_fallthru
          _
        // Predicated region
        $region93: #{tpu_custom_call.1} parent=83 // pred_check
          %p1875 = pneg %p437
        $region94: #{tpu_custom_call.1} parent=83 // pred_check_branch
          %1877 = sbr.rel (%p1875) target = $region96
        $region95: #{tpu_custom_call.1} parent=83 // pred_region
          %1879 = vsyncadd [#allocation4], 0
          %s1880 = sshll.u32 [#allocation3], 4
          %s1881 = int_to_ptr.vmem [resolvable:$true] %s1880
          %s1882 = sshll.u32 %s16, 4
          %s1883 = int_to_ptr.hbm [resolvable:$true] %s1882
          %1888 = dma.vmem_to_hbm [thread:$0]  %s1881, 256, %s1883, [#allocation4], 128, 128, 8
        $region96: #{tpu_custom_call.1} parent=83 // pred_fallthru
          _
        // Predicated region
        $region97: #{tpu_custom_call.1} parent=83 // pred_check
          %p1889 = pneg %p437
        $region98: #{tpu_custom_call.1} parent=83 // pred_check_branch
          %1891 = sbr.rel (%p1889) target = $region100
        $region99: #{tpu_custom_call.1} parent=83 // pred_region
          %1893 = dma.done [#allocation4], 256
        $region100: #{tpu_custom_call.1} parent=83 // pred_fallthru
          _
      $region84: #{tpu_custom_call.1} parent=5 // pred_fallthru
        _
      %p1894 = scmp.le.s32.totalorder 2, %s23
      // Predicated region
      $region101: #{tpu_custom_call.1} parent=5 // pred_check
        %p1895 = pneg %p1894
      $region102: #{tpu_custom_call.1} parent=5 // pred_check_branch
        %1897 = sbr.rel (%p1895) target = $region104
      $region103: #{tpu_custom_call.1} parent=5 // pred_region
        %s1898 = ssub.s32 %s23, 2
      $region104: #{tpu_custom_call.1} parent=5 // pred_fallthru
        _
    $region6: #{tpu_custom_call.1} parent=1 // loop_footer
      %s27 = sadd.s32 1, %s23
    $region7: #{tpu_custom_call.1} parent=1 // loop_footer_branch
      %22 = sbr.rel target = $region3
    $region8: #{tpu_custom_call.1} parent=1 // loop_exit
      _
    %1899 = vsyncpa [#allocation4], 1
    %s1900 = scalar_lea.sflag [#allocation4], 1
    %1901 = vsyncpa %s1900, 1

</llo_original>
